<compile_context>
chip_gen: v7x
topology: tpu7x:2x2x1
jax: 0.10.0
libtpu: 0.0.40
codegen_flags: <defaults>
</compile_context>

<pallas_src>
import math

import jax
import jax.numpy as jnp
from jax.experimental import pallas as pl
from jax.experimental.pallas import tpu as pltpu

LANE = 128


def _round_up(x, m):
    return (x + m - 1) // m * m


def _choose_tiles(n, td, tk):
    """Clamp tiles to the (lane-aligned) graph size, pick a padded N that both divide."""
    base = _round_up(n, LANE)
    td = min(td, base)
    tk = min(tk, base)
    npad = _round_up(n, math.lcm(td, tk))
    return td, tk, npad


def _vmem_limit(*operand_bytes):
    """Explicit scoped-VMEM budget: worst-case double-buffering + headroom."""
    need = 2 * sum(operand_bytes) + (4 << 20)
    return int(min(max(need, 32 << 20), 100 << 20))


def _resident_spec(block_shape, index_map, single_buffer):
    """Grid-invariant operand: request a single VMEM buffer when supported."""
    if single_buffer:
        return pl.BlockSpec(block_shape, index_map,
                            pipeline_mode=pl.Buffered(1))
    return pl.BlockSpec(block_shape, index_map)


# ----------------------------------------------------------------------------
# Host-side (per-graph / per-model) preprocessing, hoisted out of the forward.
# ----------------------------------------------------------------------------
def prepare_graph(adj, *, td=512, tk=512):
    """adj[dst, src] in {0,1}.  Runs once per graph; result reused per forward."""
    n = adj.shape[0]
    td, tk, npad = _choose_tiles(n, td, tk)

    deg_in = jnp.sum(adj, axis=1, keepdims=True)          # in-degree (dst)
    deg_out = jnp.sum(adj, axis=0, keepdims=True).T        # out-degree (src)
    dinv_in = jnp.where(deg_in > 0, 1.0 / jnp.sqrt(deg_in), 0.0)
    dinv_out = jnp.where(deg_out > 0, 1.0 / jnp.sqrt(deg_out), 0.0)

    adj_p = jnp.zeros((npad, npad), jnp.bfloat16).at[:n, :n].set(
        adj.astype(jnp.bfloat16))                           # 0/1 exact in bf16
    dinv_in_p = jnp.zeros((npad, 1), jnp.float32).at[:n].set(dinv_in)
    dinv_out_p = jnp.zeros((npad, 1), jnp.float32).at[:n].set(dinv_out)

    return dict(adj=adj_p, dinv_in=dinv_in_p, dinv_out=dinv_out_p,
                n=n, npad=npad, td=td, tk=tk)


def prepare_params(params):
    """Pre-cast weights to bf16 and lane-pad the output head.  Once per model."""
    nfeat, nhid = params["w1"].shape
    nclass = params["w2"].shape[1]
    cpad = _round_up(nclass, LANE)
    w2_pad = jnp.zeros((nhid, cpad), jnp.bfloat16).at[:, :nclass].set(
        params["w2"].astype(jnp.bfloat16))
    b2_pad = jnp.zeros((1, cpad), jnp.float32).at[0, :nclass].set(
        params["b2"].reshape(-1).astype(jnp.float32))
    return dict(
        w1=params["w1"].astype(jnp.bfloat16),
        b1=params["b1"].reshape(1, nhid).astype(jnp.float32),
        w2=w2_pad, b2=b2_pad,
        nfeat=nfeat, nhid=nhid, nclass=nclass, cpad=cpad)


# ----------------------------------------------------------------------------
# Kernel A: per-node feature transform + src-side degree scaling
#   z1s = (x @ W1) * dinv_out        (stored bf16 for the aggregation matmul)
# ----------------------------------------------------------------------------
def _xform_kernel(x_ref, w_ref, dinv_ref, z_ref):
    z = jnp.dot(x_ref[...].astype(jnp.bfloat16), w_ref[...],
                preferred_element_type=jnp.float32)
    z_ref[...] = (z * dinv_ref[...]).astype(z_ref.dtype)


def feature_transform(x, w1_bf16, dinv_out, *, tile, single_buffer_residents):
    n, fin = x.shape
    fout = w1_bf16.shape[1]
    limit = _vmem_limit(tile * fin * 4, fin * fout * 2, tile * 4,
                        tile * fout * 2)
    return pl.pallas_call(
        _xform_kernel,
        out_shape=jax.ShapeDtypeStruct((n, fout), jnp.bfloat16),
        grid=(n // tile,),
        in_specs=[
            pl.BlockSpec((tile, fin), lambda i: (i, 0)),
            _resident_spec((fin, fout), lambda i: (0, 0),
                           single_buffer_residents),          # W1 (bf16)
            pl.BlockSpec((tile, 1), lambda i: (i, 0)),
        ],
        out_specs=pl.BlockSpec((tile, fout), lambda i: (i, 0)),
        compiler_params=pltpu.CompilerParams(
            dimension_semantics=("parallel",),
            vmem_limit_bytes=limit),
    )(x, w1_bf16, dinv_out)


# ----------------------------------------------------------------------------
# Kernel B (fused, K-tiled): layer-1 aggregation + bias + ReLU + layer-2 xform
#   acc += adj_blk @ z1s_blk                     (bf16 x bf16 -> f32 MXU)
#   on last k:
#     h1  = relu(acc * dinv_in + b1)
#     z2s = (h1 @ W2_pad) * dinv_out
# ----------------------------------------------------------------------------
def _agg_relu_xform_kernel(adj_ref, z1_ref, dinv_in_ref, dinv_out_ref,
                           b1_ref, w2_ref, z2_ref, acc_ref):
    k = pl.program_id(1)

    @pl.when(k == 0)
    def _():
        acc_ref[...] = jnp.zeros_like(acc_ref)

    acc_ref[...] += jnp.dot(adj_ref[...], z1_ref[...],
                            preferred_element_type=jnp.float32)

    @pl.when(k == pl.num_programs(1) - 1)
    def _():
        h1 = jnp.maximum(acc_ref[...] * dinv_in_ref[...] + b1_ref[...], 0.0)
        # TODO(synk): F.dropout(h, p, training=True) is stochastic; identity
        # here (deterministic inference path).
        z2 = jnp.dot(h1.astype(jnp.bfloat16), w2_ref[...],
                     preferred_element_type=jnp.float32)
        z2_ref[...] = (z2 * dinv_out_ref[...]).astype(z2_ref.dtype)


def gcn_layer1_fused(adj_bf16, z1s, dinv_in, dinv_out, b1, w2_pad, *,
                     td, tk, single_buffer_residents):
    npad = adj_bf16.shape[0]
    nhid = z1s.shape[1]
    cpad = w2_pad.shape[1]
    limit = _vmem_limit(td * tk * 2, tk * nhid * 2, td * 4, td * 4,
                        nhid * 4, nhid * cpad * 2, td * cpad * 2,
                        td * nhid * 4)
    return pl.pallas_call(
        _agg_relu_xform_kernel,
        out_shape=jax.ShapeDtypeStruct((npad, cpad), jnp.bfloat16),
        grid=(npad // td, npad // tk),
        in_specs=[
            pl.BlockSpec((td, tk), lambda i, k: (i, k)),      # adj (streamed)
            pl.BlockSpec((tk, nhid), lambda i, k: (k, 0)),    # scaled src feats
            pl.BlockSpec((td, 1), lambda i, k: (i, 0)),       # D_in^{-1/2}  (dst)
            pl.BlockSpec((td, 1), lambda i, k: (i, 0)),       # D_out^{-1/2} (next src)
            _resident_spec((1, nhid), lambda i, k: (0, 0),
                           single_buffer_residents),          # b1
            _resident_spec((nhid, cpad), lambda i, k: (0, 0),
                           single_buffer_residents),          # W2 (bf16, padded)
        ],
        out_specs=pl.BlockSpec((td, cpad), lambda i, k: (i, 0)),
        scratch_shapes=[pltpu.VMEM((td, nhid), jnp.float32)],
        compiler_params=pltpu.CompilerParams(
            dimension_semantics=("parallel", "arbitrary"),
            vmem_limit_bytes=limit),
    )(adj_bf16, z1s, dinv_in, dinv_out, b1, w2_pad)


# ----------------------------------------------------------------------------
# Kernel C (K-tiled): layer-2 aggregation + dst scaling + bias
#   acc += adj_blk @ z2s_blk ;  on last k:  out = acc * dinv_in + b2_pad
# ----------------------------------------------------------------------------
def _agg_bias_kernel(adj_ref, z2_ref, dinv_in_ref, b2_ref, out_ref, acc_ref):
    k = pl.program_id(1)

    @pl.when(k == 0)
    def _():
        acc_ref[...] = jnp.zeros_like(acc_ref)

    acc_ref[...] += jnp.dot(adj_ref[...], z2_ref[...],
                            preferred_element_type=jnp.float32)

    @pl.when(k == pl.num_programs(1) - 1)
    def _():
        out_ref[...] = acc_ref[...] * dinv_in_ref[...] + b2_ref[...]


def gcn_layer2(adj_bf16, z2s, dinv_in, b2_pad, *, td, tk,
               single_buffer_residents):
    npad = adj_bf16.shape[0]
    cpad = z2s.shape[1]
    limit = _vmem_limit(td * tk * 2, tk * cpad * 2, td * 4, cpad * 4,
                        td * cpad * 4, td * cpad * 4)
    return pl.pallas_call(
        _agg_bias_kernel,
        out_shape=jax.ShapeDtypeStruct((npad, cpad), jnp.float32),
        grid=(npad // td, npad // tk),
        in_specs=[
            pl.BlockSpec((td, tk), lambda i, k: (i, k)),
            pl.BlockSpec((tk, cpad), lambda i, k: (k, 0)),
            pl.BlockSpec((td, 1), lambda i, k: (i, 0)),
            _resident_spec((1, cpad), lambda i, k: (0, 0),
                           single_buffer_residents),          # b2 (padded)
        ],
        out_specs=pl.BlockSpec((td, cpad), lambda i, k: (i, 0)),
        scratch_shapes=[pltpu.VMEM((td, cpad), jnp.float32)],
        compiler_params=pltpu.CompilerParams(
            dimension_semantics=("parallel", "arbitrary"),
            vmem_limit_bytes=limit),
    )(adj_bf16, z2s, dinv_in, b2_pad)


# ----------------------------------------------------------------------------
# Full forward: GCN.forward(g, x)  — graph / params prepared once, reused.
# ----------------------------------------------------------------------------
def _forward_impl(x, graph, prep, single_buffer_residents):
    n, npad = graph["n"], graph["npad"]
    td, tk = graph["td"], graph["tk"]
    nfeat, nclass = prep["nfeat"], prep["nclass"]

    x_p = jnp.zeros((npad, nfeat), jnp.float32).at[:n].set(
        x.astype(jnp.float32))

    # Phase A: z1s = (X @ W1) * D_out^{-1/2}   (computed once, reused per tile)
    z1s = feature_transform(x_p, prep["w1"], graph["dinv_out"], tile=td,
                            single_buffer_residents=single_buffer_residents)
    # Phase B: layer-1 aggregate + relu + layer-2 transform (fused epilogue)
    z2s = gcn_layer1_fused(graph["adj"], z1s, graph["dinv_in"],
                           graph["dinv_out"], prep["b1"], prep["w2"],
                           td=td, tk=tk,
                           single_buffer_residents=single_buffer_residents)
    # Phase C: layer-2 aggregate + bias (logits)
    out_p = gcn_layer2(graph["adj"], z2s, graph["dinv_in"], prep["b2"],
                       td=td, tk=tk,
                       single_buffer_residents=single_buffer_residents)
    return out_p[:n, :nclass]


def gcn_forward(x, graph, prep, *, single_buffer_residents=True):
    try:
        return _forward_impl(x, graph, prep, single_buffer_residents)
    except Exception:
        if not single_buffer_residents:
            raise
        # pl.Buffered(1) unsupported by this jax build: fall back to the
        # default double-buffered pipeline for the grid-invariant operands.
        return _forward_impl(x, graph, prep, False)


if __name__ == "__main__":
    N = 500          # nodes (padded to 512 -> 2 dst tiles x 2 src tiles)
    NFEAT = 32
    NHID = 128       # lane-dense hidden width
    NCLASS = 2
    TD = 256         # dst tile
    TK = 256         # src (contraction) tile

    key = jax.random.PRNGKey(0)
    ks = jax.random.split(key, 6)

    x = jax.random.normal(ks[0], (N, NFEAT), dtype=jnp.float32)

    # synthetic symmetric graph with self-loops, adj[dst, src]
    u = jax.random.uniform(ks[1], (N, N))
    a = u < 0.05
    adj = (a | a.T | jnp.eye(N, dtype=bool)).astype(jnp.float32)

    def rnd(k, shape):
        return 0.1 * jax.random.normal(k, shape, dtype=jnp.float32)

    params = {
        "w1": rnd(ks[2], (NFEAT, NHID)),
        "b1": rnd(ks[3], (NHID,)),
        "w2": rnd(ks[4], (NHID, NCLASS)),
        "b2": rnd(ks[5], (NCLASS,)),
    }

    # Hoisted per-graph / per-model preprocessing (runs once, reused per call).
    graph = prepare_graph(adj, td=TD, tk=TK)
    prep = prepare_params(params)

    out = gcn_forward(x, graph, prep)
    out = jax.block_until_ready(out)
    assert out.shape == (N, NCLASS)
    assert bool(jnp.all(jnp.isfinite(out)))

    # Pure-JAX reference (f32) — tolerance accounts for bf16 matmul operands.
    deg_in_r = adj.sum(1)
    deg_out_r = adj.sum(0)
    di = jnp.where(deg_in_r > 0, 1.0 / jnp.sqrt(deg_in_r), 0.0)
    do = jnp.where(deg_out_r > 0, 1.0 / jnp.sqrt(deg_out_r), 0.0)
    ahat = di[:, None] * adj * do[None, :]
    h1 = jnp.maximum(ahat @ (x @ params["w1"]) + params["b1"], 0.0)
    ref = ahat @ (h1 @ params["w2"]) + params["b2"]
    rel = jnp.linalg.norm(out - ref) / (jnp.linalg.norm(ref) + 1e-6)
    assert float(rel) < 0.08, f"relative error too large: {float(rel)}"

    print("KERNEL_OK")
</pallas_src>

<mosaic_0001>
module attributes {stable_mosaic.version = 11 : i64} {
  func.func @_xform_kernel(%arg0: i32, %arg1: memref<256x32xf32, #tpu.memory_space<vmem>>, %arg2: memref<32x128xbf16, #tpu.memory_space<vmem>>, %arg3: memref<256x1xf32, #tpu.memory_space<vmem>>, %arg4: memref<256x128xbf16, #tpu.memory_space<vmem>>) attributes {dimension_semantics = [#tpu.dimension_semantics<parallel>], iteration_bounds = array<i64: 2>, scalar_prefetch = 0 : i64, scratch_operands = 0 : i64, tpu.core_type = #tpu.core_type<tc>, window_params = [{transform_indices = @transform_0, window_bounds = array<i64: 256, 32>}, {pipeline_mode = #tpu.pipeline_mode<synchronous>, transform_indices = @transform_1, window_bounds = array<i64: 32, 128>}, {transform_indices = @transform_2, window_bounds = array<i64: 256, 1>}, {transform_indices = @transform_3, window_bounds = array<i64: 256, 128>}]} {
    %c0 = arith.constant 0 : index
    %c0_0 = arith.constant 0 : index
    %0 = vector.load %arg1[%c0, %c0_0] : memref<256x32xf32, #tpu.memory_space<vmem>>, vector<256x32xf32>
    %1 = arith.truncf %0 : vector<256x32xf32> to vector<256x32xbf16>
    %c0_1 = arith.constant 0 : index
    %c0_2 = arith.constant 0 : index
    %2 = vector.load %arg2[%c0_1, %c0_2] : memref<32x128xbf16, #tpu.memory_space<vmem>>, vector<32x128xbf16>
    %cst = arith.constant dense<0.000000e+00> : vector<256x128xf32>
    %3 = tpu.matmul %1, %2, %cst {dimension_numbers = #tpu.dot_dimension_numbers<[1], [0], [0], [1], [0, 0, 1, 1], [], []>} : vector<256x32xbf16>, vector<32x128xbf16>, vector<256x128xf32> -> vector<256x128xf32>
    %c0_3 = arith.constant 0 : index
    %c0_4 = arith.constant 0 : index
    %4 = vector.load %arg3[%c0_3, %c0_4] : memref<256x1xf32, #tpu.memory_space<vmem>>, vector<256x1xf32>
    %5 = vector.broadcast %4 : vector<256x1xf32> to vector<256x128xf32>
    %6 = arith.mulf %3, %5 : vector<256x128xf32>
    %7 = arith.truncf %6 : vector<256x128xf32> to vector<256x128xbf16>
    %c0_5 = arith.constant 0 : index
    %c0_6 = arith.constant 0 : index
    %8 = vector.load %arg4[%c0_5, %c0_6] : memref<256x128xbf16, #tpu.memory_space<vmem>>, vector<256x128xbf16>
    tpu.vector_store %arg4[%c0_5, %c0_6], %7 {strides = array<i32>} : memref<256x128xbf16, #tpu.memory_space<vmem>>, vector<256x128xbf16>,
    return
  }
  func.func @transform_0(%arg0: i32) -> (i32, i32) {
    %c0_i32 = arith.constant 0 : i32
    %c0_i32_0 = arith.constant 0 : i32
    return %arg0, %c0_i32 : i32, i32
  }
  func.func @transform_1(%arg0: i32) -> (i32, i32) {
    %c0_i32 = arith.constant 0 : i32
    %c0_i32_0 = arith.constant 0 : i32
    %c0_i32_1 = arith.constant 0 : i32
    return %c0_i32, %c0_i32_0 : i32, i32
  }
  func.func @transform_2(%arg0: i32) -> (i32, i32) {
    %c0_i32 = arith.constant 0 : i32
    %c0_i32_0 = arith.constant 0 : i32
    return %arg0, %c0_i32 : i32, i32
  }
  func.func @transform_3(%arg0: i32) -> (i32, i32) {
    %c0_i32 = arith.constant 0 : i32
    %c0_i32_0 = arith.constant 0 : i32
    return %arg0, %c0_i32 : i32, i32
  }
}

module attributes {stable_mosaic.version = 11 : i64} {
  func.func @_xform_kernel(%arg0: i32, %arg1: memref<256x32xf32, #tpu.memory_space<vmem>>, %arg2: memref<32x128xbf16, #tpu.memory_space<vmem>>, %arg3: memref<256x1xf32, #tpu.memory_space<vmem>>, %arg4: memref<256x128xbf16, #tpu.memory_space<vmem>>) attributes {dimension_semantics = [#tpu.dimension_semantics<parallel>], iteration_bounds = array<i64: 2>, scalar_prefetch = 0 : i64, scratch_operands = 0 : i64, tpu.core_type = #tpu.core_type<tc>, window_params = [{transform_indices = @transform_0, window_bounds = array<i64: 256, 32>}, {pipeline_mode = #tpu.pipeline_mode<synchronous>, transform_indices = @transform_1, window_bounds = array<i64: 32, 128>}, {transform_indices = @transform_2, window_bounds = array<i64: 256, 1>}, {transform_indices = @transform_3, window_bounds = array<i64: 256, 128>}]} {
    %c0 = arith.constant 0 : index
    %c0_0 = arith.constant 0 : index
    %0 = vector.load %arg1[%c0, %c0_0] : memref<256x32xf32, #tpu.memory_space<vmem>>, vector<256x32xf32>
    %1 = arith.truncf %0 : vector<256x32xf32> to vector<256x32xbf16>
    %c0_1 = arith.constant 0 : index
    %c0_2 = arith.constant 0 : index
    %2 = vector.load %arg2[%c0_1, %c0_2] : memref<32x128xbf16, #tpu.memory_space<vmem>>, vector<32x128xbf16>
    %cst = arith.constant dense<0.000000e+00> : vector<256x128xf32>
    %3 = tpu.matmul %1, %2, %cst {dimension_numbers = #tpu.dot_dimension_numbers<[1], [0], [0], [1], [0, 0, 1, 1], [], []>} : vector<256x32xbf16>, vector<32x128xbf16>, vector<256x128xf32> -> vector<256x128xf32>
    %c0_3 = arith.constant 0 : index
    %c0_4 = arith.constant 0 : index
    %4 = vector.load %arg3[%c0_3, %c0_4] : memref<256x1xf32, #tpu.memory_space<vmem>>, vector<256x1xf32>
    %5 = vector.broadcast %4 : vector<256x1xf32> to vector<256x128xf32>
    %6 = arith.mulf %3, %5 : vector<256x128xf32>
    %7 = arith.truncf %6 : vector<256x128xf32> to vector<256x128xbf16>
    %c0_5 = arith.constant 0 : index
    %c0_6 = arith.constant 0 : index
    %8 = vector.load %arg4[%c0_5, %c0_6] : memref<256x128xbf16, #tpu.memory_space<vmem>>, vector<256x128xbf16>
    tpu.vector_store %arg4[%c0_5, %c0_6], %7 {strides = array<i32>} : memref<256x128xbf16, #tpu.memory_space<vmem>>, vector<256x128xbf16>,
    return
  }
  func.func @transform_0(%arg0: i32) -> (i32, i32) {
    %c0_i32 = arith.constant 0 : i32
    %c0_i32_0 = arith.constant 0 : i32
    return %arg0, %c0_i32 : i32, i32
  }
  func.func @transform_1(%arg0: i32) -> (i32, i32) {
    %c0_i32 = arith.constant 0 : i32
    %c0_i32_0 = arith.constant 0 : i32
    %c0_i32_1 = arith.constant 0 : i32
    return %c0_i32, %c0_i32_0 : i32, i32
  }
  func.func @transform_2(%arg0: i32) -> (i32, i32) {
    %c0_i32 = arith.constant 0 : i32
    %c0_i32_0 = arith.constant 0 : i32
    return %arg0, %c0_i32 : i32, i32
  }
  func.func @transform_3(%arg0: i32) -> (i32, i32) {
    %c0_i32 = arith.constant 0 : i32
    %c0_i32_0 = arith.constant 0 : i32
    return %arg0, %c0_i32 : i32, i32
  }
}

</mosaic_0001>

<llo_original>
// kernel: tpu_custom_call.1
$region0: #{tpu_custom_call.1}
  #allocation0 [shape = 'u32[]', space=smem, size = 0x4, offset = 0x4, fixed_abs, tag = 'smem constant byte address 0x4 - core index']
  #allocation1 [shape = 'u32[144,128]{1,0:T(1,128)}', space=vmem, size = 0x12000, scoped, tag = 'internal scratch']
  %s0 = inlined_call_operand.vmem [shape: f32[512,32], index: 0, kind: input, shape index: {}]
  %s1 = inlined_call_operand.vmem [shape: bf16[32,128], index: 1, kind: input, shape index: {}]
  %s2 = inlined_call_operand.vmem [shape: f32[512,1], index: 2, kind: input, shape index: {}]
  %s3 = inlined_call_operand.hbm [shape: bf16[512,128], index: 3, kind: output, shape index: {}]
  %s4 = sld [smem:[#allocation0]]
  $region45: #{tpu_custom_call.1} parent=0
    _
  %s6 = ssub.s32 1, %s4
  %s7 = scalar_select 0, %s6, %s4
  $region1: #{tpu_custom_call.1} parent=0
    #allocation2 [shape = 'u8[131072]{0}', space=vmem, size = 0x20000, scoped, tag = 'output window, operand 0']
    #allocation3 [shape = 's32[2]{0}', space=sflag, size = 0x8, scoped, tag = 'scoped memory for tpu_custom_call.1']
    %8 = vsyncpa [#allocation3], 0
    %s9 = scalar_lea.sflag [#allocation3], 1
    %10 = vsyncpa %s9, 0
    loop: start=0, step=1, limit=4
    $region2: #{tpu_custom_call.1} parent=1 // loop_pre_header
      _
    $region3: #{tpu_custom_call.1} parent=1 // loop_header
      %s12 = sphi 0, %s16
      %p13 = scmp.ge.s32.totalorder %s12, 4
      %s22 = sphi 0, %s24
      %s25 = sphi 0, %s22
      %s26 = sphi 0, %s25
      %s42 = sphi 0, %s26
      %s46 = sphi 0, %s46
      %s48 = sphi 0, %s46
      %s49 = sphi 0, %s48
      %s63 = sphi 0, %s49
      %s69 = sphi 0, %s71
      %s72 = sphi 0, %s69
      %s73 = sphi 0, %s72
      %s89 = sphi 0, %s73
      %s95 = sphi 0, %s97
      %s98 = sphi 0, %s95
      %s99 = sphi 0, %s98
      %s115 = sphi 0, %s99
    $region4: #{tpu_custom_call.1} parent=1 // loop_header_branch
      %15 = sbr.rel (%p13) target = $region8
    $region5: #{tpu_custom_call.1} parent=1 // loop_body
      %s17 = ssub.s32 %s12, 1
      %s18 = ssub.s32 %s12, 2
      %s19 = sadd.s32 %s12, 1
      %s20 = ssub.s32 %s12, %s19
      %p21 = scmp.eq.s32.totalorder %s20, 0
      %s23 = sadd.s32 %s22, 1
      %s24 = scalar_select %p21, %s22, %s23
      %p27 = pneg %p21
      %p28 = scmp.eq.s32.totalorder %s12, 1
      %p29 = por %p27, %p28
      %p30 = scmp.ne.s32.totalorder %s22, %s25
      %p31 = scmp.eq.s32.totalorder %s12, 0
      %p32 = por %p30, %p31
      %p33 = scmp.ne.s32.totalorder %s22, %s25
      %p34 = scmp.eq.s32.totalorder %s17, 1
      %p35 = por %p33, %p34
      %p36 = scmp.ne.s32.totalorder %s25, %s26
      %p37 = scmp.eq.s32.totalorder %s17, 0
      %p38 = por %p36, %p37
      %p39 = scmp.ne.s32.totalorder %s25, %s26
      %p40 = scmp.eq.s32.totalorder %s18, 1
      %p41 = por %p39, %p40
      %p43 = scmp.ne.s32.totalorder %s26, %s42
      %p44 = scmp.eq.s32.totalorder %s18, 0
      %p45 = por %p43, %p44
      %s47 = sadd.s32 %s46, 1
      %p50 = scmp.eq.s32.totalorder %s12, 1
      %p51 = scmp.ne.s32.totalorder %s46, %s48
      %p52 = scmp.eq.s32.totalorder %s12, 0
      %p53 = por %p51, %p52
      %p54 = scmp.ne.s32.totalorder %s46, %s48
      %p55 = scmp.eq.s32.totalorder %s17, 1
      %p56 = por %p54, %p55
      %p57 = scmp.ne.s32.totalorder %s48, %s49
      %p58 = scmp.eq.s32.totalorder %s17, 0
      %p59 = por %p57, %p58
      %p60 = scmp.ne.s32.totalorder %s48, %s49
      %p61 = scmp.eq.s32.totalorder %s18, 1
      %p62 = por %p60, %p61
      %p64 = scmp.ne.s32.totalorder %s49, %s63
      %p65 = scmp.eq.s32.totalorder %s18, 0
      %p66 = por %p64, %p65
      %s67 = ssub.s32 %s12, %s19
      %p68 = scmp.eq.s32.totalorder %s67, 0
      %s70 = sadd.s32 %s69, 1
      %s71 = scalar_select %p68, %s69, %s70
      %p74 = pneg %p68
      %p75 = scmp.eq.s32.totalorder %s12, 1
      %p76 = por %p74, %p75
      %p77 = scmp.ne.s32.totalorder %s69, %s72
      %p78 = scmp.eq.s32.totalorder %s12, 0
      %p79 = por %p77, %p78
      %p80 = scmp.ne.s32.totalorder %s69, %s72
      %p81 = scmp.eq.s32.totalorder %s17, 1
      %p82 = por %p80, %p81
      %p83 = scmp.ne.s32.totalorder %s72, %s73
      %p84 = scmp.eq.s32.totalorder %s17, 0
      %p85 = por %p83, %p84
      %p86 = scmp.ne.s32.totalorder %s72, %s73
      %p87 = scmp.eq.s32.totalorder %s18, 1
      %p88 = por %p86, %p87
      %p90 = scmp.ne.s32.totalorder %s73, %s89
      %p91 = scmp.eq.s32.totalorder %s18, 0
      %p92 = por %p90, %p91
      %s93 = ssub.s32 %s12, %s19
      %p94 = scmp.eq.s32.totalorder %s93, 0
      %s96 = sadd.s32 %s95, 1
      %s97 = scalar_select %p94, %s95, %s96
      %p100 = pneg %p94
      %p101 = scmp.eq.s32.totalorder %s12, 1
      %p102 = por %p100, %p101
      %p103 = scmp.ne.s32.totalorder %s95, %s98
      %p104 = scmp.eq.s32.totalorder %s12, 0
      %p105 = por %p103, %p104
      %p106 = scmp.ne.s32.totalorder %s95, %s98
      %p107 = scmp.eq.s32.totalorder %s17, 1
      %p108 = por %p106, %p107
      %p109 = scmp.ne.s32.totalorder %s98, %s99
      %p110 = scmp.eq.s32.totalorder %s17, 0
      %p111 = por %p109, %p110
      %p112 = scmp.ne.s32.totalorder %s98, %s99
      %p113 = scmp.eq.s32.totalorder %s18, 1
      %p114 = por %p112, %p113
      %p116 = scmp.ne.s32.totalorder %s99, %s115
      %p117 = scmp.eq.s32.totalorder %s18, 0
      %p118 = por %p116, %p117
      %p119 = scmp.le.s32.totalorder 1, %s12
      %p120 = scmp.lt.s32.totalorder %s12, 3
      %p121 = pnand %p119, %p120
      %p122 = pneg %p121
      // Predicated region
      $region9: #{tpu_custom_call.1} parent=5 // pred_check
        _
      $region10: #{tpu_custom_call.1} parent=5 // pred_check_branch
        %124 = sbr.rel (%p121) target = $region12
      $region11: #{tpu_custom_call.1} parent=5 // pred_region
        %s125 = ssub.s32 %s12, 1
        // Predicated region
        $region13: #{tpu_custom_call.1} parent=11 // pred_check
          %p126 = pneg %p59
        $region14: #{tpu_custom_call.1} parent=11 // pred_check_branch
          %128 = sbr.rel (%p126) target = $region16
        $region15: #{tpu_custom_call.1} parent=11 // pred_region
          _
        $region16: #{tpu_custom_call.1} parent=11 // pred_fallthru
          _
      $region12: #{tpu_custom_call.1} parent=5 // pred_fallthru
        _
      %p129 = scmp.lt.s32.totalorder %s12, 2
      // Predicated region
      $region17: #{tpu_custom_call.1} parent=5 // pred_check
        %p130 = pneg %p129
      $region18: #{tpu_custom_call.1} parent=5 // pred_check_branch
        %132 = sbr.rel (%p130) target = $region20
      $region19: #{tpu_custom_call.1} parent=5 // pred_region
        // Predicated region
        $region21: #{tpu_custom_call.1} parent=19 // pred_check
          %p133 = pneg %p32
        $region22: #{tpu_custom_call.1} parent=19 // pred_check_branch
          %135 = sbr.rel (%p133) target = $region24
        $region23: #{tpu_custom_call.1} parent=19 // pred_region
          %s136 = smul.u32 32, %s12
          %p137 = scmp.lt.s32.totalorder %s136, 63
          %s138 = scalar_select %p137, %s136, 63
          %s139 = smul.addr %s138, 8
          %s140 = scalar_lea.vmem %s0, %s139
          %s141 = smul.u32 32, %s12
        $region24: #{tpu_custom_call.1} parent=19 // pred_fallthru
          _
        // Predicated region
        $region25: #{tpu_custom_call.1} parent=19 // pred_check
          %p142 = pneg %p79
        $region26: #{tpu_custom_call.1} parent=19 // pred_check_branch
          %144 = sbr.rel (%p142) target = $region28
        $region27: #{tpu_custom_call.1} parent=19 // pred_region
          %s145 = smul.u32 32, %s12
          %p146 = scmp.lt.s32.totalorder %s145, 63
          %s147 = scalar_select %p146, %s145, 63
          %s148 = smul.addr %s147, 8
          %s149 = scalar_lea.vmem %s2, %s148
          %s150 = smul.u32 32, %s12
        $region28: #{tpu_custom_call.1} parent=19 // pred_fallthru
          _
      $region20: #{tpu_custom_call.1} parent=5 // pred_fallthru
        _
      %p151 = scmp.le.s32.totalorder 1, %s12
      %p152 = scmp.lt.s32.totalorder %s12, 3
      %p153 = pnand %p151, %p152
      %p154 = pneg %p153
      // Predicated region
      $region29: #{tpu_custom_call.1} parent=5 // pred_check
        _
      $region30: #{tpu_custom_call.1} parent=5 // pred_check_branch
        %156 = sbr.rel (%p153) target = $region32
      $region31: #{tpu_custom_call.1} parent=5 // pred_region
        %s157 = ssub.s32 %s12, 1
        %s158 = smul.u32 32, %s17
        %p159 = scmp.lt.s32.totalorder %s158, 63
        %s160 = scalar_select %p159, %s158, 63
        %s161 = smul.addr %s160, 8
        %s162 = scalar_lea.vmem %s0, %s161
        %p163 = pneg %p38
        %p164 = pneg %p35
        %p165 = pneg %p59
        %p166 = pneg %p56
        %s167 = smul.u32 32, %s17
        %p168 = scmp.lt.s32.totalorder %s167, 63
        %s169 = scalar_select %p168, %s167, 63
        %s170 = smul.addr %s169, 8
        %s171 = scalar_lea.vmem %s2, %s170
        %p172 = pneg %p85
        %p173 = pneg %p82
        %p174 = pneg %p111
        %p175 = pneg %p108
        %s176 = sand.u32 %s98, 1
        %s177 = scalar_lea.sflag [#allocation3], %s176
        %s178 = sand.u32 %s98, 1
        %s179 = smul.addr %s178, 128
        %s180 = scalar_lea.vmem [#allocation2], %s179
        %s181 = smul.u32 32, %s17
        %p182 = scmp.lt.s32.totalorder %s181, 63
        %s183 = scalar_select %p182, %s181, 63
        %s184 = smul.addr %s183, 8
        %s185 = scalar_lea.vmem %s0, %s184
        %s186 = smul.u32 32, %s17
        %s187 = smul.u32 32, %s17
        %p188 = scmp.lt.s32.totalorder %s187, 63
        %s189 = scalar_select %p188, %s187, 63
        %s190 = smul.addr %s189, 8
        %s191 = scalar_lea.vmem %s2, %s190
        %s192 = smul.u32 32, %s17
        %s193 = smul.u32 32, %s17
        %v195 = vld [vmem:[%s185] sm:$0xff]
        %v196 = vld [vmem:[%s185 + $0x8] sm:$0xff]
        %v197 = vld [vmem:[%s185 + $0x10] sm:$0xff]
        %v198 = vld [vmem:[%s185 + $0x18] sm:$0xff]
        %v199 = vld [vmem:[%s185 + $0x20] sm:$0xff]
        %v200 = vld [vmem:[%s185 + $0x28] sm:$0xff]
        %v201 = vld [vmem:[%s185 + $0x30] sm:$0xff]
        %v202 = vld [vmem:[%s185 + $0x38] sm:$0xff]
        %v203 = vld [vmem:[%s185 + $0x40] sm:$0xff]
        %v204 = vld [vmem:[%s185 + $0x48] sm:$0xff]
        %v205 = vld [vmem:[%s185 + $0x50] sm:$0xff]
        %v206 = vld [vmem:[%s185 + $0x58] sm:$0xff]
        %v207 = vld [vmem:[%s185 + $0x60] sm:$0xff]
        %v208 = vld [vmem:[%s185 + $0x68] sm:$0xff]
        %v209 = vld [vmem:[%s185 + $0x70] sm:$0xff]
        %v210 = vld [vmem:[%s185 + $0x78] sm:$0xff]
        %v211 = vld [vmem:[%s185 + $0x80] sm:$0xff]
        %v212 = vld [vmem:[%s185 + $0x88] sm:$0xff]
        %v213 = vld [vmem:[%s185 + $0x90] sm:$0xff]
        %v214 = vld [vmem:[%s185 + $0x98] sm:$0xff]
        %v215 = vld [vmem:[%s185 + $0xa0] sm:$0xff]
        %v216 = vld [vmem:[%s185 + $0xa8] sm:$0xff]
        %v217 = vld [vmem:[%s185 + $0xb0] sm:$0xff]
        %v218 = vld [vmem:[%s185 + $0xb8] sm:$0xff]
        %v219 = vld [vmem:[%s185 + $0xc0] sm:$0xff]
        %v220 = vld [vmem:[%s185 + $0xc8] sm:$0xff]
        %v221 = vld [vmem:[%s185 + $0xd0] sm:$0xff]
        %v222 = vld [vmem:[%s185 + $0xd8] sm:$0xff]
        %v223 = vld [vmem:[%s185 + $0xe0] sm:$0xff]
        %v224 = vld [vmem:[%s185 + $0xe8] sm:$0xff]
        %v225 = vld [vmem:[%s185 + $0xf0] sm:$0xff]
        %v226 = vld [vmem:[%s185 + $0xf8] sm:$0xff]
        %v227 = vpack.c.bf16 %v196, %v195
        %v228 = vpack.c.bf16 %v198, %v197
        %v229 = vpack.c.bf16 %v200, %v199
        %v230 = vpack.c.bf16 %v202, %v201
        %v231 = vpack.c.bf16 %v204, %v203
        %v232 = vpack.c.bf16 %v206, %v205
        %v233 = vpack.c.bf16 %v208, %v207
        %v234 = vpack.c.bf16 %v210, %v209
        %v235 = vpack.c.bf16 %v212, %v211
        %v236 = vpack.c.bf16 %v214, %v213
        %v237 = vpack.c.bf16 %v216, %v215
        %v238 = vpack.c.bf16 %v218, %v217
        %v239 = vpack.c.bf16 %v220, %v219
        %v240 = vpack.c.bf16 %v222, %v221
        %v241 = vpack.c.bf16 %v224, %v223
        %v242 = vpack.c.bf16 %v226, %v225
        %v243 = vld [vmem:[%s1] sm:$0xf]
        %v244 = vld [vmem:[%s1 + $0x4] sm:$0xf]
        %v245 = vld [vmem:[%s1 + $0x8] sm:$0xf]
        %v246 = vld [vmem:[%s1 + $0xc] sm:$0xf]
        %v251 = vunpack.c.l.b16 %v243
        %v252 = vunpack.c.l.b16 %v244
        %v253 = vunpack.c.l.b16 %v245
        %v254 = vunpack.c.l.b16 %v246
        %v255 = vpack.c.b16 %v252, %v251
        %v256 = vpack.c.b16 %v254, %v253
        %vm259 = vcmask 261120
        %v261 = vsel %vm259, %v227, 0
        %v264 = vsel %vm259, %v228, 0
        %v267 = vsel %vm259, %v229, 0
        %v270 = vsel %vm259, %v230, 0
        %v273 = vsel %vm259, %v231, 0
        %v276 = vsel %vm259, %v232, 0
        %v279 = vsel %vm259, %v233, 0
        %v282 = vsel %vm259, %v234, 0
        %v285 = vsel %vm259, %v235, 0
        %v288 = vsel %vm259, %v236, 0
        %v291 = vsel %vm259, %v237, 0
        %v294 = vsel %vm259, %v238, 0
        %v297 = vsel %vm259, %v239, 0
        %v300 = vsel %vm259, %v240, 0
        %v303 = vsel %vm259, %v241, 0
        %v306 = vsel %vm259, %v242, 0
        %308 = vmatprep.subr.bf16.mxu0 0
        %309 = vmatpush1.bf16.msra.mxu0 %v255
        %310 = vmatprep.subr.bf16.mxu0 0
        %311 = vmatpush1.bf16.msra.mxu0 %v256
        %312 = vmatprep.subr.bf16.mxu0 0
        %313 = vmatpush1.bf16.msra.mxu0 0
        %314 = vmatprep.subr.bf16.mxu0 0
        %315 = vmatpush1.bf16.msra.mxu0 0
        %316 = vmatprep.subr.bf16.mxu0 0
        %317 = vmatpush1.bf16.msra.mxu0 0
        %318 = vmatprep.subr.bf16.mxu0 0
        %319 = vmatpush1.bf16.msra.mxu0 0
        %320 = vmatprep.subr.bf16.mxu0 0
        %321 = vmatpush1.bf16.msra.mxu0 0
        %322 = vmatprep.subr.bf16.mxu0 0
        %323 = vmatpush1.bf16.msra.mxu0 0
        %324 = vmatprep.subr.bf16.mxu0 0
        %325 = vmatpush1.bf16.msra.mxu0 0
        %326 = vmatprep.subr.bf16.mxu0 0
        %327 = vmatpush1.bf16.msra.mxu0 0
        %328 = vmatprep.subr.bf16.mxu0 0
        %329 = vmatpush1.bf16.msra.mxu0 0
        %330 = vmatprep.subr.bf16.mxu0 0
        %331 = vmatpush1.bf16.msra.mxu0 0
        %332 = vmatprep.subr.bf16.mxu0 0
        %333 = vmatpush1.bf16.msra.mxu0 0
        %334 = vmatprep.subr.bf16.mxu0 0
        %335 = vmatpush1.bf16.msra.mxu0 0
        %336 = vmatprep.subr.bf16.mxu0 0
        %337 = vmatpush1.bf16.msra.mxu0 0
        %338 = vmatprep.subr.bf16.mxu0 0
        %339 = vmatpush1.bf16.msra.mxu0 0
        %340 = vmatprep.mubr.bf16.mxu0 0
        %341 = vmatmul.mubr.bf16.gmra.mrb[0].mxu0 %v261
        %v342 = vpop.f32.mrb[0].mxu0
        %v343 = vadd.f32 0.0, %v342
        %v344 = vpop.f32.mrb[0].mxu0
        %v345 = vpop.f32.mrb[0].mxu0
        %v346 = vadd.f32 0.0, %v345
        %v347 = vpop.f32.mrb[0].mxu0
        %348 = vmatprep.mubr.bf16.mxu0 0
        %349 = vmatmul.mubr.bf16.gmra.mrb[0].mxu0 %v264
        %v350 = vpop.f32.mrb[0].mxu0
        %v351 = vadd.f32 0.0, %v350
        %v352 = vpop.f32.mrb[0].mxu0
        %v353 = vpop.f32.mrb[0].mxu0
        %v354 = vadd.f32 0.0, %v353
        %v355 = vpop.f32.mrb[0].mxu0
        %356 = vmatprep.mubr.bf16.mxu0 0
        %357 = vmatmul.mubr.bf16.gmra.mrb[0].mxu0 %v267
        %v358 = vpop.f32.mrb[0].mxu0
        %v359 = vadd.f32 0.0, %v358
        %v360 = vpop.f32.mrb[0].mxu0
        %v361 = vpop.f32.mrb[0].mxu0
        %v362 = vadd.f32 0.0, %v361
        %v363 = vpop.f32.mrb[0].mxu0
        %364 = vmatprep.mubr.bf16.mxu0 0
        %365 = vmatmul.mubr.bf16.gmra.mrb[0].mxu0 %v270
        %v366 = vpop.f32.mrb[0].mxu0
        %v367 = vadd.f32 0.0, %v366
        %v368 = vpop.f32.mrb[0].mxu0
        %v369 = vpop.f32.mrb[0].mxu0
        %v370 = vadd.f32 0.0, %v369
        %v371 = vpop.f32.mrb[0].mxu0
        %372 = vmatprep.mubr.bf16.mxu0 0
        %373 = vmatmul.mubr.bf16.gmra.mrb[0].mxu0 %v273
        %v374 = vpop.f32.mrb[0].mxu0
        %v375 = vadd.f32 0.0, %v374
        %v376 = vpop.f32.mrb[0].mxu0
        %v377 = vpop.f32.mrb[0].mxu0
        %v378 = vadd.f32 0.0, %v377
        %v379 = vpop.f32.mrb[0].mxu0
        %380 = vmatprep.mubr.bf16.mxu0 0
        %381 = vmatmul.mubr.bf16.gmra.mrb[0].mxu0 %v276
        %v382 = vpop.f32.mrb[0].mxu0
        %v383 = vadd.f32 0.0, %v382
        %v384 = vpop.f32.mrb[0].mxu0
        %v385 = vpop.f32.mrb[0].mxu0
        %v386 = vadd.f32 0.0, %v385
        %v387 = vpop.f32.mrb[0].mxu0
        %388 = vmatprep.mubr.bf16.mxu0 0
        %389 = vmatmul.mubr.bf16.gmra.mrb[0].mxu0 %v279
        %v390 = vpop.f32.mrb[0].mxu0
        %v391 = vadd.f32 0.0, %v390
        %v392 = vpop.f32.mrb[0].mxu0
        %v393 = vpop.f32.mrb[0].mxu0
        %v394 = vadd.f32 0.0, %v393
        %v395 = vpop.f32.mrb[0].mxu0
        %396 = vmatprep.mubr.bf16.mxu0 0
        %397 = vmatmul.mubr.bf16.gmra.mrb[0].mxu0 %v282
        %v398 = vpop.f32.mrb[0].mxu0
        %v399 = vadd.f32 0.0, %v398
        %v400 = vpop.f32.mrb[0].mxu0
        %v401 = vpop.f32.mrb[0].mxu0
        %v402 = vadd.f32 0.0, %v401
        %v403 = vpop.f32.mrb[0].mxu0
        %404 = vmatprep.mubr.bf16.mxu0 0
        %405 = vmatmul.mubr.bf16.gmra.mrb[0].mxu0 %v285
        %v406 = vpop.f32.mrb[0].mxu0
        %v407 = vadd.f32 0.0, %v406
        %v408 = vpop.f32.mrb[0].mxu0
        %v409 = vpop.f32.mrb[0].mxu0
        %v410 = vadd.f32 0.0, %v409
        %v411 = vpop.f32.mrb[0].mxu0
        %412 = vmatprep.mubr.bf16.mxu0 0
        %413 = vmatmul.mubr.bf16.gmra.mrb[0].mxu0 %v288
        %v414 = vpop.f32.mrb[0].mxu0
        %v415 = vadd.f32 0.0, %v414
        %v416 = vpop.f32.mrb[0].mxu0
        %v417 = vpop.f32.mrb[0].mxu0
        %v418 = vadd.f32 0.0, %v417
        %v419 = vpop.f32.mrb[0].mxu0
        %420 = vmatprep.mubr.bf16.mxu0 0
        %421 = vmatmul.mubr.bf16.gmra.mrb[0].mxu0 %v291
        %v422 = vpop.f32.mrb[0].mxu0
        %v423 = vadd.f32 0.0, %v422
        %v424 = vpop.f32.mrb[0].mxu0
        %v425 = vpop.f32.mrb[0].mxu0
        %v426 = vadd.f32 0.0, %v425
        %v427 = vpop.f32.mrb[0].mxu0
        %428 = vmatprep.mubr.bf16.mxu0 0
        %429 = vmatmul.mubr.bf16.gmra.mrb[0].mxu0 %v294
        %v430 = vpop.f32.mrb[0].mxu0
        %v431 = vadd.f32 0.0, %v430
        %v432 = vpop.f32.mrb[0].mxu0
        %v433 = vpop.f32.mrb[0].mxu0
        %v434 = vadd.f32 0.0, %v433
        %v435 = vpop.f32.mrb[0].mxu0
        %436 = vmatprep.mubr.bf16.mxu0 0
        %437 = vmatmul.mubr.bf16.gmra.mrb[0].mxu0 %v297
        %v438 = vpop.f32.mrb[0].mxu0
        %v439 = vadd.f32 0.0, %v438
        %v440 = vpop.f32.mrb[0].mxu0
        %v441 = vpop.f32.mrb[0].mxu0
        %v442 = vadd.f32 0.0, %v441
        %v443 = vpop.f32.mrb[0].mxu0
        %444 = vmatprep.mubr.bf16.mxu0 0
        %445 = vmatmul.mubr.bf16.gmra.mrb[0].mxu0 %v300
        %v446 = vpop.f32.mrb[0].mxu0
        %v447 = vadd.f32 0.0, %v446
        %v448 = vpop.f32.mrb[0].mxu0
        %v449 = vpop.f32.mrb[0].mxu0
        %v450 = vadd.f32 0.0, %v449
        %v451 = vpop.f32.mrb[0].mxu0
        %452 = vmatprep.mubr.bf16.mxu0 0
        %453 = vmatmul.mubr.bf16.gmra.mrb[0].mxu0 %v303
        %v454 = vpop.f32.mrb[0].mxu0
        %v455 = vadd.f32 0.0, %v454
        %v456 = vpop.f32.mrb[0].mxu0
        %v457 = vpop.f32.mrb[0].mxu0
        %v458 = vadd.f32 0.0, %v457
        %v459 = vpop.f32.mrb[0].mxu0
        %460 = vmatprep.mubr.bf16.mxu0 0
        %461 = vmatmul.mubr.bf16.gmra.mrb[0].mxu0 %v306
        %v462 = vpop.f32.mrb[0].mxu0
        %v463 = vadd.f32 0.0, %v462
        %v464 = vpop.f32.mrb[0].mxu0
        %v465 = vpop.f32.mrb[0].mxu0
        %v466 = vadd.f32 0.0, %v465
        %v467 = vpop.f32.mrb[0].mxu0
        %468 = vdwg.mxu0
        %v469 = vld [vmem:[%s191] sm:$0xff]
        %v470 = vld [vmem:[%s191 + $0x8] sm:$0xff]
        %v471 = vld [vmem:[%s191 + $0x10] sm:$0xff]
        %v472 = vld [vmem:[%s191 + $0x18] sm:$0xff]
        %v473 = vld [vmem:[%s191 + $0x20] sm:$0xff]
        %v474 = vld [vmem:[%s191 + $0x28] sm:$0xff]
        %v475 = vld [vmem:[%s191 + $0x30] sm:$0xff]
        %v476 = vld [vmem:[%s191 + $0x38] sm:$0xff]
        %v477 = vld [vmem:[%s191 + $0x40] sm:$0xff]
        %v478 = vld [vmem:[%s191 + $0x48] sm:$0xff]
        %v479 = vld [vmem:[%s191 + $0x50] sm:$0xff]
        %v480 = vld [vmem:[%s191 + $0x58] sm:$0xff]
        %v481 = vld [vmem:[%s191 + $0x60] sm:$0xff]
        %v482 = vld [vmem:[%s191 + $0x68] sm:$0xff]
        %v483 = vld [vmem:[%s191 + $0x70] sm:$0xff]
        %v484 = vld [vmem:[%s191 + $0x78] sm:$0xff]
        %v485 = vld [vmem:[%s191 + $0x80] sm:$0xff]
        %v486 = vld [vmem:[%s191 + $0x88] sm:$0xff]
        %v487 = vld [vmem:[%s191 + $0x90] sm:$0xff]
        %v488 = vld [vmem:[%s191 + $0x98] sm:$0xff]
        %v489 = vld [vmem:[%s191 + $0xa0] sm:$0xff]
        %v490 = vld [vmem:[%s191 + $0xa8] sm:$0xff]
        %v491 = vld [vmem:[%s191 + $0xb0] sm:$0xff]
        %v492 = vld [vmem:[%s191 + $0xb8] sm:$0xff]
        %v493 = vld [vmem:[%s191 + $0xc0] sm:$0xff]
        %v494 = vld [vmem:[%s191 + $0xc8] sm:$0xff]
        %v495 = vld [vmem:[%s191 + $0xd0] sm:$0xff]
        %v496 = vld [vmem:[%s191 + $0xd8] sm:$0xff]
        %v497 = vld [vmem:[%s191 + $0xe0] sm:$0xff]
        %v498 = vld [vmem:[%s191 + $0xe8] sm:$0xff]
        %v499 = vld [vmem:[%s191 + $0xf0] sm:$0xff]
        %v500 = vld [vmem:[%s191 + $0xf8] sm:$0xff]
        %502 = vset.pattern.permute.xlu0 0
        %503 = vperm.xlu0 %502, %v469
        %v504 = vpop.permute.xlu0 %503
        %507 = vset.pattern.permute.xlu0 0
        %508 = vperm.xlu0 %507, %v470
        %v509 = vpop.permute.xlu0 %508
        %512 = vset.pattern.permute.xlu0 0
        %513 = vperm.xlu0 %512, %v471
        %v514 = vpop.permute.xlu0 %513
        %517 = vset.pattern.permute.xlu0 0
        %518 = vperm.xlu0 %517, %v472
        %v519 = vpop.permute.xlu0 %518
        %522 = vset.pattern.permute.xlu0 0
        %523 = vperm.xlu0 %522, %v473
        %v524 = vpop.permute.xlu0 %523
        %527 = vset.pattern.permute.xlu0 0
        %528 = vperm.xlu0 %527, %v474
        %v529 = vpop.permute.xlu0 %528
        %532 = vset.pattern.permute.xlu0 0
        %533 = vperm.xlu0 %532, %v475
        %v534 = vpop.permute.xlu0 %533
        %537 = vset.pattern.permute.xlu0 0
        %538 = vperm.xlu0 %537, %v476
        %v539 = vpop.permute.xlu0 %538
        %542 = vset.pattern.permute.xlu0 0
        %543 = vperm.xlu0 %542, %v477
        %v544 = vpop.permute.xlu0 %543
        %547 = vset.pattern.permute.xlu0 0
        %548 = vperm.xlu0 %547, %v478
        %v549 = vpop.permute.xlu0 %548
        %552 = vset.pattern.permute.xlu0 0
        %553 = vperm.xlu0 %552, %v479
        %v554 = vpop.permute.xlu0 %553
        %557 = vset.pattern.permute.xlu0 0
        %558 = vperm.xlu0 %557, %v480
        %v559 = vpop.permute.xlu0 %558
        %562 = vset.pattern.permute.xlu0 0
        %563 = vperm.xlu0 %562, %v481
        %v564 = vpop.permute.xlu0 %563
        %567 = vset.pattern.permute.xlu0 0
        %568 = vperm.xlu0 %567, %v482
        %v569 = vpop.permute.xlu0 %568
        %572 = vset.pattern.permute.xlu0 0
        %573 = vperm.xlu0 %572, %v483
        %v574 = vpop.permute.xlu0 %573
        %577 = vset.pattern.permute.xlu0 0
        %578 = vperm.xlu0 %577, %v484
        %v579 = vpop.permute.xlu0 %578
        %582 = vset.pattern.permute.xlu0 0
        %583 = vperm.xlu0 %582, %v485
        %v584 = vpop.permute.xlu0 %583
        %587 = vset.pattern.permute.xlu0 0
        %588 = vperm.xlu0 %587, %v486
        %v589 = vpop.permute.xlu0 %588
        %592 = vset.pattern.permute.xlu0 0
        %593 = vperm.xlu0 %592, %v487
        %v594 = vpop.permute.xlu0 %593
        %597 = vset.pattern.permute.xlu0 0
        %598 = vperm.xlu0 %597, %v488
        %v599 = vpop.permute.xlu0 %598
        %602 = vset.pattern.permute.xlu0 0
        %603 = vperm.xlu0 %602, %v489
        %v604 = vpop.permute.xlu0 %603
        %607 = vset.pattern.permute.xlu0 0
        %608 = vperm.xlu0 %607, %v490
        %v609 = vpop.permute.xlu0 %608
        %612 = vset.pattern.permute.xlu0 0
        %613 = vperm.xlu0 %612, %v491
        %v614 = vpop.permute.xlu0 %613
        %617 = vset.pattern.permute.xlu0 0
        %618 = vperm.xlu0 %617, %v492
        %v619 = vpop.permute.xlu0 %618
        %622 = vset.pattern.permute.xlu0 0
        %623 = vperm.xlu0 %622, %v493
        %v624 = vpop.permute.xlu0 %623
        %627 = vset.pattern.permute.xlu0 0
        %628 = vperm.xlu0 %627, %v494
        %v629 = vpop.permute.xlu0 %628
        %632 = vset.pattern.permute.xlu0 0
        %633 = vperm.xlu0 %632, %v495
        %v634 = vpop.permute.xlu0 %633
        %637 = vset.pattern.permute.xlu0 0
        %638 = vperm.xlu0 %637, %v496
        %v639 = vpop.permute.xlu0 %638
        %642 = vset.pattern.permute.xlu0 0
        %643 = vperm.xlu0 %642, %v497
        %v644 = vpop.permute.xlu0 %643
        %647 = vset.pattern.permute.xlu0 0
        %648 = vperm.xlu0 %647, %v498
        %v649 = vpop.permute.xlu0 %648
        %652 = vset.pattern.permute.xlu0 0
        %653 = vperm.xlu0 %652, %v499
        %v654 = vpop.permute.xlu0 %653
        %657 = vset.pattern.permute.xlu0 0
        %658 = vperm.xlu0 %657, %v500
        %v659 = vpop.permute.xlu0 %658
        %v661 = vmul.f32 %v343, %v504
        %v662 = vmul.f32 %v346, %v509
        %v663 = vmul.f32 %v351, %v514
        %v664 = vmul.f32 %v354, %v519
        %v665 = vmul.f32 %v359, %v524
        %v666 = vmul.f32 %v362, %v529
        %v667 = vmul.f32 %v367, %v534
        %v668 = vmul.f32 %v370, %v539
        %v669 = vmul.f32 %v375, %v544
        %v670 = vmul.f32 %v378, %v549
        %v671 = vmul.f32 %v383, %v554
        %v672 = vmul.f32 %v386, %v559
        %v673 = vmul.f32 %v391, %v564
        %v674 = vmul.f32 %v394, %v569
        %v675 = vmul.f32 %v399, %v574
        %v676 = vmul.f32 %v402, %v579
        %v677 = vmul.f32 %v407, %v584
        %v678 = vmul.f32 %v410, %v589
        %v679 = vmul.f32 %v415, %v594
        %v680 = vmul.f32 %v418, %v599
        %v681 = vmul.f32 %v423, %v604
        %v682 = vmul.f32 %v426, %v609
        %v683 = vmul.f32 %v431, %v614
        %v684 = vmul.f32 %v434, %v619
        %v685 = vmul.f32 %v439, %v624
        %v686 = vmul.f32 %v442, %v629
        %v687 = vmul.f32 %v447, %v634
        %v688 = vmul.f32 %v450, %v639
        %v689 = vmul.f32 %v455, %v644
        %v690 = vmul.f32 %v458, %v649
        %v691 = vmul.f32 %v463, %v654
        %v692 = vmul.f32 %v466, %v659
        %v693 = vpack.c.bf16 %v662, %v661
        %v694 = vpack.c.bf16 %v664, %v663
        %v695 = vpack.c.bf16 %v666, %v665
        %v696 = vpack.c.bf16 %v668, %v667
        %v697 = vpack.c.bf16 %v670, %v669
        %v698 = vpack.c.bf16 %v672, %v671
        %v699 = vpack.c.bf16 %v674, %v673
        %v700 = vpack.c.bf16 %v676, %v675
        %v701 = vpack.c.bf16 %v678, %v677
        %v702 = vpack.c.bf16 %v680, %v679
        %v703 = vpack.c.bf16 %v682, %v681
        %v704 = vpack.c.bf16 %v684, %v683
        %v705 = vpack.c.bf16 %v686, %v685
        %v706 = vpack.c.bf16 %v688, %v687
        %v707 = vpack.c.bf16 %v690, %v689
        %v708 = vpack.c.bf16 %v692, %v691
        %v725 = vunpack.c.l.b16 %v693
        %v726 = vunpack.c.h.b16 %v693
        %v727 = vunpack.c.l.b16 %v694
        %v728 = vunpack.c.h.b16 %v694
        %v729 = vunpack.c.l.b16 %v695
        %v730 = vunpack.c.h.b16 %v695
        %v731 = vunpack.c.l.b16 %v696
        %v732 = vunpack.c.h.b16 %v696
        %v733 = vunpack.c.l.b16 %v697
        %v734 = vunpack.c.h.b16 %v697
        %v735 = vunpack.c.l.b16 %v698
        %v736 = vunpack.c.h.b16 %v698
        %v737 = vunpack.c.l.b16 %v699
        %v738 = vunpack.c.h.b16 %v699
        %v739 = vunpack.c.l.b16 %v700
        %v740 = vunpack.c.h.b16 %v700
        %v741 = vunpack.c.l.b16 %v701
        %v742 = vunpack.c.h.b16 %v701
        %v743 = vunpack.c.l.b16 %v702
        %v744 = vunpack.c.h.b16 %v702
        %v745 = vunpack.c.l.b16 %v703
        %v746 = vunpack.c.h.b16 %v703
        %v747 = vunpack.c.l.b16 %v704
        %v748 = vunpack.c.h.b16 %v704
        %v749 = vunpack.c.l.b16 %v705
        %v750 = vunpack.c.h.b16 %v705
        %v751 = vunpack.c.l.b16 %v706
        %v752 = vunpack.c.h.b16 %v706
        %v753 = vunpack.c.l.b16 %v707
        %v754 = vunpack.c.h.b16 %v707
        %v755 = vunpack.c.l.b16 %v708
        %v756 = vunpack.c.h.b16 %v708
        %v757 = vpack.c.b16 %v725, %v725
        %v758 = vpack.c.b16 %v726, %v726
        %v759 = vpack.c.b16 %v727, %v727
        %v760 = vpack.c.b16 %v728, %v728
        %v761 = vpack.c.b16 %v729, %v729
        %v762 = vpack.c.b16 %v730, %v730
        %v763 = vpack.c.b16 %v731, %v731
        %v764 = vpack.c.b16 %v732, %v732
        %v765 = vpack.c.b16 %v733, %v733
        %v766 = vpack.c.b16 %v734, %v734
        %v767 = vpack.c.b16 %v735, %v735
        %v768 = vpack.c.b16 %v736, %v736
        %v769 = vpack.c.b16 %v737, %v737
        %v770 = vpack.c.b16 %v738, %v738
        %v771 = vpack.c.b16 %v739, %v739
        %v772 = vpack.c.b16 %v740, %v740
        %v773 = vpack.c.b16 %v741, %v741
        %v774 = vpack.c.b16 %v742, %v742
        %v775 = vpack.c.b16 %v743, %v743
        %v776 = vpack.c.b16 %v744, %v744
        %v777 = vpack.c.b16 %v745, %v745
        %v778 = vpack.c.b16 %v746, %v746
        %v779 = vpack.c.b16 %v747, %v747
        %v780 = vpack.c.b16 %v748, %v748
        %v781 = vpack.c.b16 %v749, %v749
        %v782 = vpack.c.b16 %v750, %v750
        %v783 = vpack.c.b16 %v751, %v751
        %v784 = vpack.c.b16 %v752, %v752
        %v785 = vpack.c.b16 %v753, %v753
        %v786 = vpack.c.b16 %v754, %v754
        %v787 = vpack.c.b16 %v755, %v755
        %v788 = vpack.c.b16 %v756, %v756
        %821 = vst [vmem:[%s180] sm:$0xf] %v757
        %822 = vst [vmem:[%s180 + $0x4] sm:$0xf] %v758
        %823 = vst [vmem:[%s180 + $0x8] sm:$0xf] %v759
        %824 = vst [vmem:[%s180 + $0xc] sm:$0xf] %v760
        %825 = vst [vmem:[%s180 + $0x10] sm:$0xf] %v761
        %826 = vst [vmem:[%s180 + $0x14] sm:$0xf] %v762
        %827 = vst [vmem:[%s180 + $0x18] sm:$0xf] %v763
        %828 = vst [vmem:[%s180 + $0x1c] sm:$0xf] %v764
        %829 = vst [vmem:[%s180 + $0x20] sm:$0xf] %v765
        %830 = vst [vmem:[%s180 + $0x24] sm:$0xf] %v766
        %831 = vst [vmem:[%s180 + $0x28] sm:$0xf] %v767
        %832 = vst [vmem:[%s180 + $0x2c] sm:$0xf] %v768
        %833 = vst [vmem:[%s180 + $0x30] sm:$0xf] %v769
        %834 = vst [vmem:[%s180 + $0x34] sm:$0xf] %v770
        %835 = vst [vmem:[%s180 + $0x38] sm:$0xf] %v771
        %836 = vst [vmem:[%s180 + $0x3c] sm:$0xf] %v772
        %837 = vst [vmem:[%s180 + $0x40] sm:$0xf] %v773
        %838 = vst [vmem:[%s180 + $0x44] sm:$0xf] %v774
        %839 = vst [vmem:[%s180 + $0x48] sm:$0xf] %v775
        %840 = vst [vmem:[%s180 + $0x4c] sm:$0xf] %v776
        %841 = vst [vmem:[%s180 + $0x50] sm:$0xf] %v777
        %842 = vst [vmem:[%s180 + $0x54] sm:$0xf] %v778
        %843 = vst [vmem:[%s180 + $0x58] sm:$0xf] %v779
        %844 = vst [vmem:[%s180 + $0x5c] sm:$0xf] %v780
        %845 = vst [vmem:[%s180 + $0x60] sm:$0xf] %v781
        %846 = vst [vmem:[%s180 + $0x64] sm:$0xf] %v782
        %847 = vst [vmem:[%s180 + $0x68] sm:$0xf] %v783
        %848 = vst [vmem:[%s180 + $0x6c] sm:$0xf] %v784
        %849 = vst [vmem:[%s180 + $0x70] sm:$0xf] %v785
        %850 = vst [vmem:[%s180 + $0x74] sm:$0xf] %v786
        %851 = vst [vmem:[%s180 + $0x78] sm:$0xf] %v787
        %852 = vst [vmem:[%s180 + $0x7c] sm:$0xf] %v788
        %s853 = sand.u32 %s98, 1
        %s854 = scalar_lea.sflag [#allocation3], %s853
        %s855 = sand.u32 %s98, 1
        %s856 = smul.addr %s855, 128
        %s857 = scalar_lea.vmem [#allocation2], %s856
        // Predicated region
        $region33: #{tpu_custom_call.1} parent=31 // pred_check
          %p858 = pneg %p108
        $region34: #{tpu_custom_call.1} parent=31 // pred_check_branch
          %860 = sbr.rel (%p858) target = $region36
        $region35: #{tpu_custom_call.1} parent=31 // pred_region
          %s861 = smul.u32 32, %s17
          %s863 = ssub.s32 2048, 2048
          %864 = vsyncadd %s854, %s863
          %s865 = smul.addr %s861, 64
          %s866 = scalar_lea.hbm %s3, %s865
          %s867 = sshll.u32 %s857, 4
          %s868 = int_to_ptr.vmem [resolvable:$true] %s867
          %873 = dma.vmem_to_hbm [thread:$0]  %s868, 2048, %s866, %s854, 64, 64, 4
        $region36: #{tpu_custom_call.1} parent=31 // pred_fallthru
          _
      $region32: #{tpu_custom_call.1} parent=5 // pred_fallthru
        _
      %p874 = scmp.le.s32.totalorder 2, %s12
      // Predicated region
      $region37: #{tpu_custom_call.1} parent=5 // pred_check
        %p875 = pneg %p874
      $region38: #{tpu_custom_call.1} parent=5 // pred_check_branch
        %877 = sbr.rel (%p875) target = $region40
      $region39: #{tpu_custom_call.1} parent=5 // pred_region
        %s878 = ssub.s32 %s12, 2
        // Predicated region
        $region41: #{tpu_custom_call.1} parent=39 // pred_check
          %p879 = pneg %p114
        $region42: #{tpu_custom_call.1} parent=39 // pred_check_branch
          %881 = sbr.rel (%p879) target = $region44
        $region43: #{tpu_custom_call.1} parent=39 // pred_region
          %s882 = sand.u32 %s99, 1
          %s883 = scalar_lea.sflag [#allocation3], %s882
          %s884 = sand.u32 %s99, 1
          %s885 = smul.addr %s884, 128
          %s886 = scalar_lea.vmem [#allocation2], %s885
          %887 = dma.done %s883, 2048
        $region44: #{tpu_custom_call.1} parent=39 // pred_fallthru
          _
      $region40: #{tpu_custom_call.1} parent=5 // pred_fallthru
        _
    $region6: #{tpu_custom_call.1} parent=1 // loop_footer
      %s16 = sadd.s32 1, %s12
    $region7: #{tpu_custom_call.1} parent=1 // loop_footer_branch
      %11 = sbr.rel target = $region3
    $region8: #{tpu_custom_call.1} parent=1 // loop_exit
      _
    %888 = vsyncpa [#allocation3], 1
    %s889 = scalar_lea.sflag [#allocation3], 1
    %890 = vsyncpa %s889, 1

// kernel: tpu_custom_call.1
$region0: #{tpu_custom_call.1}
  #allocation0 [shape = 'u32[]', space=smem, size = 0x4, offset = 0x4, fixed_abs, tag = 'smem constant byte address 0x4 - core index']
  #allocation1 [shape = 'u32[144,128]{1,0:T(1,128)}', space=vmem, size = 0x12000, scoped, tag = 'internal scratch']
  %s0 = inlined_call_operand.vmem [shape: f32[512,32], index: 0, kind: input, shape index: {}]
  %s1 = inlined_call_operand.vmem [shape: bf16[32,128], index: 1, kind: input, shape index: {}]
  %s2 = inlined_call_operand.vmem [shape: f32[512,1], index: 2, kind: input, shape index: {}]
  %s3 = inlined_call_operand.hbm [shape: bf16[512,128], index: 3, kind: output, shape index: {}]
  %s4 = sld [smem:[#allocation0]]
  $region45: #{tpu_custom_call.1} parent=0
    _
  %s6 = ssub.s32 1, %s4
  %s7 = scalar_select 0, %s6, %s4
  $region1: #{tpu_custom_call.1} parent=0
    #allocation2 [shape = 'u8[131072]{0}', space=vmem, size = 0x20000, scoped, tag = 'output window, operand 0']
    #allocation3 [shape = 's32[2]{0}', space=sflag, size = 0x8, scoped, tag = 'scoped memory for tpu_custom_call.1']
    %8 = vsyncpa [#allocation3], 0
    %s9 = scalar_lea.sflag [#allocation3], 1
    %10 = vsyncpa %s9, 0
    loop: start=0, step=1, limit=4
    $region2: #{tpu_custom_call.1} parent=1 // loop_pre_header
      _
    $region3: #{tpu_custom_call.1} parent=1 // loop_header
      %s12 = sphi 0, %s16
      %p13 = scmp.ge.s32.totalorder %s12, 4
      %s22 = sphi 0, %s24
      %s25 = sphi 0, %s22
      %s26 = sphi 0, %s25
      %s42 = sphi 0, %s26
      %s46 = sphi 0, %s46
      %s48 = sphi 0, %s46
      %s49 = sphi 0, %s48
      %s63 = sphi 0, %s49
      %s69 = sphi 0, %s71
      %s72 = sphi 0, %s69
      %s73 = sphi 0, %s72
      %s89 = sphi 0, %s73
      %s95 = sphi 0, %s97
      %s98 = sphi 0, %s95
      %s99 = sphi 0, %s98
      %s115 = sphi 0, %s99
    $region4: #{tpu_custom_call.1} parent=1 // loop_header_branch
      %15 = sbr.rel (%p13) target = $region8
    $region5: #{tpu_custom_call.1} parent=1 // loop_body
      %s17 = ssub.s32 %s12, 1
      %s18 = ssub.s32 %s12, 2
      %s19 = sadd.s32 %s12, 1
      %s20 = ssub.s32 %s12, %s19
      %p21 = scmp.eq.s32.totalorder %s20, 0
      %s23 = sadd.s32 %s22, 1
      %s24 = scalar_select %p21, %s22, %s23
      %p27 = pneg %p21
      %p28 = scmp.eq.s32.totalorder %s12, 1
      %p29 = por %p27, %p28
      %p30 = scmp.ne.s32.totalorder %s22, %s25
      %p31 = scmp.eq.s32.totalorder %s12, 0
      %p32 = por %p30, %p31
      %p33 = scmp.ne.s32.totalorder %s22, %s25
      %p34 = scmp.eq.s32.totalorder %s17, 1
      %p35 = por %p33, %p34
      %p36 = scmp.ne.s32.totalorder %s25, %s26
      %p37 = scmp.eq.s32.totalorder %s17, 0
      %p38 = por %p36, %p37
      %p39 = scmp.ne.s32.totalorder %s25, %s26
      %p40 = scmp.eq.s32.totalorder %s18, 1
      %p41 = por %p39, %p40
      %p43 = scmp.ne.s32.totalorder %s26, %s42
      %p44 = scmp.eq.s32.totalorder %s18, 0
      %p45 = por %p43, %p44
      %s47 = sadd.s32 %s46, 1
      %p50 = scmp.eq.s32.totalorder %s12, 1
      %p51 = scmp.ne.s32.totalorder %s46, %s48
      %p52 = scmp.eq.s32.totalorder %s12, 0
      %p53 = por %p51, %p52
      %p54 = scmp.ne.s32.totalorder %s46, %s48
      %p55 = scmp.eq.s32.totalorder %s17, 1
      %p56 = por %p54, %p55
      %p57 = scmp.ne.s32.totalorder %s48, %s49
      %p58 = scmp.eq.s32.totalorder %s17, 0
      %p59 = por %p57, %p58
      %p60 = scmp.ne.s32.totalorder %s48, %s49
      %p61 = scmp.eq.s32.totalorder %s18, 1
      %p62 = por %p60, %p61
      %p64 = scmp.ne.s32.totalorder %s49, %s63
      %p65 = scmp.eq.s32.totalorder %s18, 0
      %p66 = por %p64, %p65
      %s67 = ssub.s32 %s12, %s19
      %p68 = scmp.eq.s32.totalorder %s67, 0
      %s70 = sadd.s32 %s69, 1
      %s71 = scalar_select %p68, %s69, %s70
      %p74 = pneg %p68
      %p75 = scmp.eq.s32.totalorder %s12, 1
      %p76 = por %p74, %p75
      %p77 = scmp.ne.s32.totalorder %s69, %s72
      %p78 = scmp.eq.s32.totalorder %s12, 0
      %p79 = por %p77, %p78
      %p80 = scmp.ne.s32.totalorder %s69, %s72
      %p81 = scmp.eq.s32.totalorder %s17, 1
      %p82 = por %p80, %p81
      %p83 = scmp.ne.s32.totalorder %s72, %s73
      %p84 = scmp.eq.s32.totalorder %s17, 0
      %p85 = por %p83, %p84
      %p86 = scmp.ne.s32.totalorder %s72, %s73
      %p87 = scmp.eq.s32.totalorder %s18, 1
      %p88 = por %p86, %p87
      %p90 = scmp.ne.s32.totalorder %s73, %s89
      %p91 = scmp.eq.s32.totalorder %s18, 0
      %p92 = por %p90, %p91
      %s93 = ssub.s32 %s12, %s19
      %p94 = scmp.eq.s32.totalorder %s93, 0
      %s96 = sadd.s32 %s95, 1
      %s97 = scalar_select %p94, %s95, %s96
      %p100 = pneg %p94
      %p101 = scmp.eq.s32.totalorder %s12, 1
      %p102 = por %p100, %p101
      %p103 = scmp.ne.s32.totalorder %s95, %s98
      %p104 = scmp.eq.s32.totalorder %s12, 0
      %p105 = por %p103, %p104
      %p106 = scmp.ne.s32.totalorder %s95, %s98
      %p107 = scmp.eq.s32.totalorder %s17, 1
      %p108 = por %p106, %p107
      %p109 = scmp.ne.s32.totalorder %s98, %s99
      %p110 = scmp.eq.s32.totalorder %s17, 0
      %p111 = por %p109, %p110
      %p112 = scmp.ne.s32.totalorder %s98, %s99
      %p113 = scmp.eq.s32.totalorder %s18, 1
      %p114 = por %p112, %p113
      %p116 = scmp.ne.s32.totalorder %s99, %s115
      %p117 = scmp.eq.s32.totalorder %s18, 0
      %p118 = por %p116, %p117
      %p119 = scmp.le.s32.totalorder 1, %s12
      %p120 = scmp.lt.s32.totalorder %s12, 3
      %p121 = pnand %p119, %p120
      %p122 = pneg %p121
      // Predicated region
      $region9: #{tpu_custom_call.1} parent=5 // pred_check
        _
      $region10: #{tpu_custom_call.1} parent=5 // pred_check_branch
        %124 = sbr.rel (%p121) target = $region12
      $region11: #{tpu_custom_call.1} parent=5 // pred_region
        %s125 = ssub.s32 %s12, 1
        // Predicated region
        $region13: #{tpu_custom_call.1} parent=11 // pred_check
          %p126 = pneg %p59
        $region14: #{tpu_custom_call.1} parent=11 // pred_check_branch
          %128 = sbr.rel (%p126) target = $region16
        $region15: #{tpu_custom_call.1} parent=11 // pred_region
          _
        $region16: #{tpu_custom_call.1} parent=11 // pred_fallthru
          _
      $region12: #{tpu_custom_call.1} parent=5 // pred_fallthru
        _
      %p129 = scmp.lt.s32.totalorder %s12, 2
      // Predicated region
      $region17: #{tpu_custom_call.1} parent=5 // pred_check
        %p130 = pneg %p129
      $region18: #{tpu_custom_call.1} parent=5 // pred_check_branch
        %132 = sbr.rel (%p130) target = $region20
      $region19: #{tpu_custom_call.1} parent=5 // pred_region
        // Predicated region
        $region21: #{tpu_custom_call.1} parent=19 // pred_check
          %p133 = pneg %p32
        $region22: #{tpu_custom_call.1} parent=19 // pred_check_branch
          %135 = sbr.rel (%p133) target = $region24
        $region23: #{tpu_custom_call.1} parent=19 // pred_region
          %s136 = smul.u32 32, %s12
          %p137 = scmp.lt.s32.totalorder %s136, 63
          %s138 = scalar_select %p137, %s136, 63
          %s139 = smul.addr %s138, 8
          %s140 = scalar_lea.vmem %s0, %s139
          %s141 = smul.u32 32, %s12
        $region24: #{tpu_custom_call.1} parent=19 // pred_fallthru
          _
        // Predicated region
        $region25: #{tpu_custom_call.1} parent=19 // pred_check
          %p142 = pneg %p79
        $region26: #{tpu_custom_call.1} parent=19 // pred_check_branch
          %144 = sbr.rel (%p142) target = $region28
        $region27: #{tpu_custom_call.1} parent=19 // pred_region
          %s145 = smul.u32 32, %s12
          %p146 = scmp.lt.s32.totalorder %s145, 63
          %s147 = scalar_select %p146, %s145, 63
          %s148 = smul.addr %s147, 8
          %s149 = scalar_lea.vmem %s2, %s148
          %s150 = smul.u32 32, %s12
        $region28: #{tpu_custom_call.1} parent=19 // pred_fallthru
          _
      $region20: #{tpu_custom_call.1} parent=5 // pred_fallthru
        _
      %p151 = scmp.le.s32.totalorder 1, %s12
      %p152 = scmp.lt.s32.totalorder %s12, 3
      %p153 = pnand %p151, %p152
      %p154 = pneg %p153
      // Predicated region
      $region29: #{tpu_custom_call.1} parent=5 // pred_check
        _
      $region30: #{tpu_custom_call.1} parent=5 // pred_check_branch
        %156 = sbr.rel (%p153) target = $region32
      $region31: #{tpu_custom_call.1} parent=5 // pred_region
        %s157 = ssub.s32 %s12, 1
        %s158 = smul.u32 32, %s17
        %p159 = scmp.lt.s32.totalorder %s158, 63
        %s160 = scalar_select %p159, %s158, 63
        %s161 = smul.addr %s160, 8
        %s162 = scalar_lea.vmem %s0, %s161
        %p163 = pneg %p38
        %p164 = pneg %p35
        %p165 = pneg %p59
        %p166 = pneg %p56
        %s167 = smul.u32 32, %s17
        %p168 = scmp.lt.s32.totalorder %s167, 63
        %s169 = scalar_select %p168, %s167, 63
        %s170 = smul.addr %s169, 8
        %s171 = scalar_lea.vmem %s2, %s170
        %p172 = pneg %p85
        %p173 = pneg %p82
        %p174 = pneg %p111
        %p175 = pneg %p108
        %s176 = sand.u32 %s98, 1
        %s177 = scalar_lea.sflag [#allocation3], %s176
        %s178 = sand.u32 %s98, 1
        %s179 = smul.addr %s178, 128
        %s180 = scalar_lea.vmem [#allocation2], %s179
        %s181 = smul.u32 32, %s17
        %p182 = scmp.lt.s32.totalorder %s181, 63
        %s183 = scalar_select %p182, %s181, 63
        %s184 = smul.addr %s183, 8
        %s185 = scalar_lea.vmem %s0, %s184
        %s186 = smul.u32 32, %s17
        %s187 = smul.u32 32, %s17
        %p188 = scmp.lt.s32.totalorder %s187, 63
        %s189 = scalar_select %p188, %s187, 63
        %s190 = smul.addr %s189, 8
        %s191 = scalar_lea.vmem %s2, %s190
        %s192 = smul.u32 32, %s17
        %s193 = smul.u32 32, %s17
        %v195 = vld [vmem:[%s185] sm:$0xff]
        %v196 = vld [vmem:[%s185 + $0x8] sm:$0xff]
        %v197 = vld [vmem:[%s185 + $0x10] sm:$0xff]
        %v198 = vld [vmem:[%s185 + $0x18] sm:$0xff]
        %v199 = vld [vmem:[%s185 + $0x20] sm:$0xff]
        %v200 = vld [vmem:[%s185 + $0x28] sm:$0xff]
        %v201 = vld [vmem:[%s185 + $0x30] sm:$0xff]
        %v202 = vld [vmem:[%s185 + $0x38] sm:$0xff]
        %v203 = vld [vmem:[%s185 + $0x40] sm:$0xff]
        %v204 = vld [vmem:[%s185 + $0x48] sm:$0xff]
        %v205 = vld [vmem:[%s185 + $0x50] sm:$0xff]
        %v206 = vld [vmem:[%s185 + $0x58] sm:$0xff]
        %v207 = vld [vmem:[%s185 + $0x60] sm:$0xff]
        %v208 = vld [vmem:[%s185 + $0x68] sm:$0xff]
        %v209 = vld [vmem:[%s185 + $0x70] sm:$0xff]
        %v210 = vld [vmem:[%s185 + $0x78] sm:$0xff]
        %v211 = vld [vmem:[%s185 + $0x80] sm:$0xff]
        %v212 = vld [vmem:[%s185 + $0x88] sm:$0xff]
        %v213 = vld [vmem:[%s185 + $0x90] sm:$0xff]
        %v214 = vld [vmem:[%s185 + $0x98] sm:$0xff]
        %v215 = vld [vmem:[%s185 + $0xa0] sm:$0xff]
        %v216 = vld [vmem:[%s185 + $0xa8] sm:$0xff]
        %v217 = vld [vmem:[%s185 + $0xb0] sm:$0xff]
        %v218 = vld [vmem:[%s185 + $0xb8] sm:$0xff]
        %v219 = vld [vmem:[%s185 + $0xc0] sm:$0xff]
        %v220 = vld [vmem:[%s185 + $0xc8] sm:$0xff]
        %v221 = vld [vmem:[%s185 + $0xd0] sm:$0xff]
        %v222 = vld [vmem:[%s185 + $0xd8] sm:$0xff]
        %v223 = vld [vmem:[%s185 + $0xe0] sm:$0xff]
        %v224 = vld [vmem:[%s185 + $0xe8] sm:$0xff]
        %v225 = vld [vmem:[%s185 + $0xf0] sm:$0xff]
        %v226 = vld [vmem:[%s185 + $0xf8] sm:$0xff]
        %v227 = vpack.c.bf16 %v196, %v195
        %v228 = vpack.c.bf16 %v198, %v197
        %v229 = vpack.c.bf16 %v200, %v199
        %v230 = vpack.c.bf16 %v202, %v201
        %v231 = vpack.c.bf16 %v204, %v203
        %v232 = vpack.c.bf16 %v206, %v205
        %v233 = vpack.c.bf16 %v208, %v207
        %v234 = vpack.c.bf16 %v210, %v209
        %v235 = vpack.c.bf16 %v212, %v211
        %v236 = vpack.c.bf16 %v214, %v213
        %v237 = vpack.c.bf16 %v216, %v215
        %v238 = vpack.c.bf16 %v218, %v217
        %v239 = vpack.c.bf16 %v220, %v219
        %v240 = vpack.c.bf16 %v222, %v221
        %v241 = vpack.c.bf16 %v224, %v223
        %v242 = vpack.c.bf16 %v226, %v225
        %v243 = vld [vmem:[%s1] sm:$0xf]
        %v244 = vld [vmem:[%s1 + $0x4] sm:$0xf]
        %v245 = vld [vmem:[%s1 + $0x8] sm:$0xf]
        %v246 = vld [vmem:[%s1 + $0xc] sm:$0xf]
        %v251 = vunpack.c.l.b16 %v243
        %v252 = vunpack.c.l.b16 %v244
        %v253 = vunpack.c.l.b16 %v245
        %v254 = vunpack.c.l.b16 %v246
        %v255 = vpack.c.b16 %v252, %v251
        %v256 = vpack.c.b16 %v254, %v253
        %vm259 = vcmask 261120
        %v261 = vsel %vm259, %v227, 0
        %v264 = vsel %vm259, %v228, 0
        %v267 = vsel %vm259, %v229, 0
        %v270 = vsel %vm259, %v230, 0
        %v273 = vsel %vm259, %v231, 0
        %v276 = vsel %vm259, %v232, 0
        %v279 = vsel %vm259, %v233, 0
        %v282 = vsel %vm259, %v234, 0
        %v285 = vsel %vm259, %v235, 0
        %v288 = vsel %vm259, %v236, 0
        %v291 = vsel %vm259, %v237, 0
        %v294 = vsel %vm259, %v238, 0
        %v297 = vsel %vm259, %v239, 0
        %v300 = vsel %vm259, %v240, 0
        %v303 = vsel %vm259, %v241, 0
        %v306 = vsel %vm259, %v242, 0
        %308 = vmatprep.subr.bf16.mxu0 0
        %309 = vmatpush1.bf16.msra.mxu0 %v255
        %310 = vmatprep.subr.bf16.mxu0 0
        %311 = vmatpush1.bf16.msra.mxu0 %v256
        %312 = vmatprep.subr.bf16.mxu0 0
        %313 = vmatpush1.bf16.msra.mxu0 0
        %314 = vmatprep.subr.bf16.mxu0 0
        %315 = vmatpush1.bf16.msra.mxu0 0
        %316 = vmatprep.subr.bf16.mxu0 0
        %317 = vmatpush1.bf16.msra.mxu0 0
        %318 = vmatprep.subr.bf16.mxu0 0
        %319 = vmatpush1.bf16.msra.mxu0 0
        %320 = vmatprep.subr.bf16.mxu0 0
        %321 = vmatpush1.bf16.msra.mxu0 0
        %322 = vmatprep.subr.bf16.mxu0 0
        %323 = vmatpush1.bf16.msra.mxu0 0
        %324 = vmatprep.subr.bf16.mxu0 0
        %325 = vmatpush1.bf16.msra.mxu0 0
        %326 = vmatprep.subr.bf16.mxu0 0
        %327 = vmatpush1.bf16.msra.mxu0 0
        %328 = vmatprep.subr.bf16.mxu0 0
        %329 = vmatpush1.bf16.msra.mxu0 0
        %330 = vmatprep.subr.bf16.mxu0 0
        %331 = vmatpush1.bf16.msra.mxu0 0
        %332 = vmatprep.subr.bf16.mxu0 0
        %333 = vmatpush1.bf16.msra.mxu0 0
        %334 = vmatprep.subr.bf16.mxu0 0
        %335 = vmatpush1.bf16.msra.mxu0 0
        %336 = vmatprep.subr.bf16.mxu0 0
        %337 = vmatpush1.bf16.msra.mxu0 0
        %338 = vmatprep.subr.bf16.mxu0 0
        %339 = vmatpush1.bf16.msra.mxu0 0
        %340 = vmatprep.mubr.bf16.mxu0 0
        %341 = vmatmul.mubr.bf16.gmra.mrb[0].mxu0 %v261
        %v342 = vpop.f32.mrb[0].mxu0
        %v343 = vadd.f32 0.0, %v342
        %v344 = vpop.f32.mrb[0].mxu0
        %v345 = vpop.f32.mrb[0].mxu0
        %v346 = vadd.f32 0.0, %v345
        %v347 = vpop.f32.mrb[0].mxu0
        %348 = vmatprep.mubr.bf16.mxu0 0
        %349 = vmatmul.mubr.bf16.gmra.mrb[0].mxu0 %v264
        %v350 = vpop.f32.mrb[0].mxu0
        %v351 = vadd.f32 0.0, %v350
        %v352 = vpop.f32.mrb[0].mxu0
        %v353 = vpop.f32.mrb[0].mxu0
        %v354 = vadd.f32 0.0, %v353
        %v355 = vpop.f32.mrb[0].mxu0
        %356 = vmatprep.mubr.bf16.mxu0 0
        %357 = vmatmul.mubr.bf16.gmra.mrb[0].mxu0 %v267
        %v358 = vpop.f32.mrb[0].mxu0
        %v359 = vadd.f32 0.0, %v358
        %v360 = vpop.f32.mrb[0].mxu0
        %v361 = vpop.f32.mrb[0].mxu0
        %v362 = vadd.f32 0.0, %v361
        %v363 = vpop.f32.mrb[0].mxu0
        %364 = vmatprep.mubr.bf16.mxu0 0
        %365 = vmatmul.mubr.bf16.gmra.mrb[0].mxu0 %v270
        %v366 = vpop.f32.mrb[0].mxu0
        %v367 = vadd.f32 0.0, %v366
        %v368 = vpop.f32.mrb[0].mxu0
        %v369 = vpop.f32.mrb[0].mxu0
        %v370 = vadd.f32 0.0, %v369
        %v371 = vpop.f32.mrb[0].mxu0
        %372 = vmatprep.mubr.bf16.mxu0 0
        %373 = vmatmul.mubr.bf16.gmra.mrb[0].mxu0 %v273
        %v374 = vpop.f32.mrb[0].mxu0
        %v375 = vadd.f32 0.0, %v374
        %v376 = vpop.f32.mrb[0].mxu0
        %v377 = vpop.f32.mrb[0].mxu0
        %v378 = vadd.f32 0.0, %v377
        %v379 = vpop.f32.mrb[0].mxu0
        %380 = vmatprep.mubr.bf16.mxu0 0
        %381 = vmatmul.mubr.bf16.gmra.mrb[0].mxu0 %v276
        %v382 = vpop.f32.mrb[0].mxu0
        %v383 = vadd.f32 0.0, %v382
        %v384 = vpop.f32.mrb[0].mxu0
        %v385 = vpop.f32.mrb[0].mxu0
        %v386 = vadd.f32 0.0, %v385
        %v387 = vpop.f32.mrb[0].mxu0
        %388 = vmatprep.mubr.bf16.mxu0 0
        %389 = vmatmul.mubr.bf16.gmra.mrb[0].mxu0 %v279
        %v390 = vpop.f32.mrb[0].mxu0
        %v391 = vadd.f32 0.0, %v390
        %v392 = vpop.f32.mrb[0].mxu0
        %v393 = vpop.f32.mrb[0].mxu0
        %v394 = vadd.f32 0.0, %v393
        %v395 = vpop.f32.mrb[0].mxu0
        %396 = vmatprep.mubr.bf16.mxu0 0
        %397 = vmatmul.mubr.bf16.gmra.mrb[0].mxu0 %v282
        %v398 = vpop.f32.mrb[0].mxu0
        %v399 = vadd.f32 0.0, %v398
        %v400 = vpop.f32.mrb[0].mxu0
        %v401 = vpop.f32.mrb[0].mxu0
        %v402 = vadd.f32 0.0, %v401
        %v403 = vpop.f32.mrb[0].mxu0
        %404 = vmatprep.mubr.bf16.mxu0 0
        %405 = vmatmul.mubr.bf16.gmra.mrb[0].mxu0 %v285
        %v406 = vpop.f32.mrb[0].mxu0
        %v407 = vadd.f32 0.0, %v406
        %v408 = vpop.f32.mrb[0].mxu0
        %v409 = vpop.f32.mrb[0].mxu0
        %v410 = vadd.f32 0.0, %v409
        %v411 = vpop.f32.mrb[0].mxu0
        %412 = vmatprep.mubr.bf16.mxu0 0
        %413 = vmatmul.mubr.bf16.gmra.mrb[0].mxu0 %v288
        %v414 = vpop.f32.mrb[0].mxu0
        %v415 = vadd.f32 0.0, %v414
        %v416 = vpop.f32.mrb[0].mxu0
        %v417 = vpop.f32.mrb[0].mxu0
        %v418 = vadd.f32 0.0, %v417
        %v419 = vpop.f32.mrb[0].mxu0
        %420 = vmatprep.mubr.bf16.mxu0 0
        %421 = vmatmul.mubr.bf16.gmra.mrb[0].mxu0 %v291
        %v422 = vpop.f32.mrb[0].mxu0
        %v423 = vadd.f32 0.0, %v422
        %v424 = vpop.f32.mrb[0].mxu0
        %v425 = vpop.f32.mrb[0].mxu0
        %v426 = vadd.f32 0.0, %v425
        %v427 = vpop.f32.mrb[0].mxu0
        %428 = vmatprep.mubr.bf16.mxu0 0
        %429 = vmatmul.mubr.bf16.gmra.mrb[0].mxu0 %v294
        %v430 = vpop.f32.mrb[0].mxu0
        %v431 = vadd.f32 0.0, %v430
        %v432 = vpop.f32.mrb[0].mxu0
        %v433 = vpop.f32.mrb[0].mxu0
        %v434 = vadd.f32 0.0, %v433
        %v435 = vpop.f32.mrb[0].mxu0
        %436 = vmatprep.mubr.bf16.mxu0 0
        %437 = vmatmul.mubr.bf16.gmra.mrb[0].mxu0 %v297
        %v438 = vpop.f32.mrb[0].mxu0
        %v439 = vadd.f32 0.0, %v438
        %v440 = vpop.f32.mrb[0].mxu0
        %v441 = vpop.f32.mrb[0].mxu0
        %v442 = vadd.f32 0.0, %v441
        %v443 = vpop.f32.mrb[0].mxu0
        %444 = vmatprep.mubr.bf16.mxu0 0
        %445 = vmatmul.mubr.bf16.gmra.mrb[0].mxu0 %v300
        %v446 = vpop.f32.mrb[0].mxu0
        %v447 = vadd.f32 0.0, %v446
        %v448 = vpop.f32.mrb[0].mxu0
        %v449 = vpop.f32.mrb[0].mxu0
        %v450 = vadd.f32 0.0, %v449
        %v451 = vpop.f32.mrb[0].mxu0
        %452 = vmatprep.mubr.bf16.mxu0 0
        %453 = vmatmul.mubr.bf16.gmra.mrb[0].mxu0 %v303
        %v454 = vpop.f32.mrb[0].mxu0
        %v455 = vadd.f32 0.0, %v454
        %v456 = vpop.f32.mrb[0].mxu0
        %v457 = vpop.f32.mrb[0].mxu0
        %v458 = vadd.f32 0.0, %v457
        %v459 = vpop.f32.mrb[0].mxu0
        %460 = vmatprep.mubr.bf16.mxu0 0
        %461 = vmatmul.mubr.bf16.gmra.mrb[0].mxu0 %v306
        %v462 = vpop.f32.mrb[0].mxu0
        %v463 = vadd.f32 0.0, %v462
        %v464 = vpop.f32.mrb[0].mxu0
        %v465 = vpop.f32.mrb[0].mxu0
        %v466 = vadd.f32 0.0, %v465
        %v467 = vpop.f32.mrb[0].mxu0
        %468 = vdwg.mxu0
        %v469 = vld [vmem:[%s191] sm:$0xff]
        %v470 = vld [vmem:[%s191 + $0x8] sm:$0xff]
        %v471 = vld [vmem:[%s191 + $0x10] sm:$0xff]
        %v472 = vld [vmem:[%s191 + $0x18] sm:$0xff]
        %v473 = vld [vmem:[%s191 + $0x20] sm:$0xff]
        %v474 = vld [vmem:[%s191 + $0x28] sm:$0xff]
        %v475 = vld [vmem:[%s191 + $0x30] sm:$0xff]
        %v476 = vld [vmem:[%s191 + $0x38] sm:$0xff]
        %v477 = vld [vmem:[%s191 + $0x40] sm:$0xff]
        %v478 = vld [vmem:[%s191 + $0x48] sm:$0xff]
        %v479 = vld [vmem:[%s191 + $0x50] sm:$0xff]
        %v480 = vld [vmem:[%s191 + $0x58] sm:$0xff]
        %v481 = vld [vmem:[%s191 + $0x60] sm:$0xff]
        %v482 = vld [vmem:[%s191 + $0x68] sm:$0xff]
        %v483 = vld [vmem:[%s191 + $0x70] sm:$0xff]
        %v484 = vld [vmem:[%s191 + $0x78] sm:$0xff]
        %v485 = vld [vmem:[%s191 + $0x80] sm:$0xff]
        %v486 = vld [vmem:[%s191 + $0x88] sm:$0xff]
        %v487 = vld [vmem:[%s191 + $0x90] sm:$0xff]
        %v488 = vld [vmem:[%s191 + $0x98] sm:$0xff]
        %v489 = vld [vmem:[%s191 + $0xa0] sm:$0xff]
        %v490 = vld [vmem:[%s191 + $0xa8] sm:$0xff]
        %v491 = vld [vmem:[%s191 + $0xb0] sm:$0xff]
        %v492 = vld [vmem:[%s191 + $0xb8] sm:$0xff]
        %v493 = vld [vmem:[%s191 + $0xc0] sm:$0xff]
        %v494 = vld [vmem:[%s191 + $0xc8] sm:$0xff]
        %v495 = vld [vmem:[%s191 + $0xd0] sm:$0xff]
        %v496 = vld [vmem:[%s191 + $0xd8] sm:$0xff]
        %v497 = vld [vmem:[%s191 + $0xe0] sm:$0xff]
        %v498 = vld [vmem:[%s191 + $0xe8] sm:$0xff]
        %v499 = vld [vmem:[%s191 + $0xf0] sm:$0xff]
        %v500 = vld [vmem:[%s191 + $0xf8] sm:$0xff]
        %502 = vset.pattern.permute.xlu0 0
        %503 = vperm.xlu0 %502, %v469
        %v504 = vpop.permute.xlu0 %503
        %507 = vset.pattern.permute.xlu0 0
        %508 = vperm.xlu0 %507, %v470
        %v509 = vpop.permute.xlu0 %508
        %512 = vset.pattern.permute.xlu0 0
        %513 = vperm.xlu0 %512, %v471
        %v514 = vpop.permute.xlu0 %513
        %517 = vset.pattern.permute.xlu0 0
        %518 = vperm.xlu0 %517, %v472
        %v519 = vpop.permute.xlu0 %518
        %522 = vset.pattern.permute.xlu0 0
        %523 = vperm.xlu0 %522, %v473
        %v524 = vpop.permute.xlu0 %523
        %527 = vset.pattern.permute.xlu0 0
        %528 = vperm.xlu0 %527, %v474
        %v529 = vpop.permute.xlu0 %528
        %532 = vset.pattern.permute.xlu0 0
        %533 = vperm.xlu0 %532, %v475
        %v534 = vpop.permute.xlu0 %533
        %537 = vset.pattern.permute.xlu0 0
        %538 = vperm.xlu0 %537, %v476
        %v539 = vpop.permute.xlu0 %538
        %542 = vset.pattern.permute.xlu0 0
        %543 = vperm.xlu0 %542, %v477
        %v544 = vpop.permute.xlu0 %543
        %547 = vset.pattern.permute.xlu0 0
        %548 = vperm.xlu0 %547, %v478
        %v549 = vpop.permute.xlu0 %548
        %552 = vset.pattern.permute.xlu0 0
        %553 = vperm.xlu0 %552, %v479
        %v554 = vpop.permute.xlu0 %553
        %557 = vset.pattern.permute.xlu0 0
        %558 = vperm.xlu0 %557, %v480
        %v559 = vpop.permute.xlu0 %558
        %562 = vset.pattern.permute.xlu0 0
        %563 = vperm.xlu0 %562, %v481
        %v564 = vpop.permute.xlu0 %563
        %567 = vset.pattern.permute.xlu0 0
        %568 = vperm.xlu0 %567, %v482
        %v569 = vpop.permute.xlu0 %568
        %572 = vset.pattern.permute.xlu0 0
        %573 = vperm.xlu0 %572, %v483
        %v574 = vpop.permute.xlu0 %573
        %577 = vset.pattern.permute.xlu0 0
        %578 = vperm.xlu0 %577, %v484
        %v579 = vpop.permute.xlu0 %578
        %582 = vset.pattern.permute.xlu0 0
        %583 = vperm.xlu0 %582, %v485
        %v584 = vpop.permute.xlu0 %583
        %587 = vset.pattern.permute.xlu0 0
        %588 = vperm.xlu0 %587, %v486
        %v589 = vpop.permute.xlu0 %588
        %592 = vset.pattern.permute.xlu0 0
        %593 = vperm.xlu0 %592, %v487
        %v594 = vpop.permute.xlu0 %593
        %597 = vset.pattern.permute.xlu0 0
        %598 = vperm.xlu0 %597, %v488
        %v599 = vpop.permute.xlu0 %598
        %602 = vset.pattern.permute.xlu0 0
        %603 = vperm.xlu0 %602, %v489
        %v604 = vpop.permute.xlu0 %603
        %607 = vset.pattern.permute.xlu0 0
        %608 = vperm.xlu0 %607, %v490
        %v609 = vpop.permute.xlu0 %608
        %612 = vset.pattern.permute.xlu0 0
        %613 = vperm.xlu0 %612, %v491
        %v614 = vpop.permute.xlu0 %613
        %617 = vset.pattern.permute.xlu0 0
        %618 = vperm.xlu0 %617, %v492
        %v619 = vpop.permute.xlu0 %618
        %622 = vset.pattern.permute.xlu0 0
        %623 = vperm.xlu0 %622, %v493
        %v624 = vpop.permute.xlu0 %623
        %627 = vset.pattern.permute.xlu0 0
        %628 = vperm.xlu0 %627, %v494
        %v629 = vpop.permute.xlu0 %628
        %632 = vset.pattern.permute.xlu0 0
        %633 = vperm.xlu0 %632, %v495
        %v634 = vpop.permute.xlu0 %633
        %637 = vset.pattern.permute.xlu0 0
        %638 = vperm.xlu0 %637, %v496
        %v639 = vpop.permute.xlu0 %638
        %642 = vset.pattern.permute.xlu0 0
        %643 = vperm.xlu0 %642, %v497
        %v644 = vpop.permute.xlu0 %643
        %647 = vset.pattern.permute.xlu0 0
        %648 = vperm.xlu0 %647, %v498
        %v649 = vpop.permute.xlu0 %648
        %652 = vset.pattern.permute.xlu0 0
        %653 = vperm.xlu0 %652, %v499
        %v654 = vpop.permute.xlu0 %653
        %657 = vset.pattern.permute.xlu0 0
        %658 = vperm.xlu0 %657, %v500
        %v659 = vpop.permute.xlu0 %658
        %v661 = vmul.f32 %v343, %v504
        %v662 = vmul.f32 %v346, %v509
        %v663 = vmul.f32 %v351, %v514
        %v664 = vmul.f32 %v354, %v519
        %v665 = vmul.f32 %v359, %v524
        %v666 = vmul.f32 %v362, %v529
        %v667 = vmul.f32 %v367, %v534
        %v668 = vmul.f32 %v370, %v539
        %v669 = vmul.f32 %v375, %v544
        %v670 = vmul.f32 %v378, %v549
        %v671 = vmul.f32 %v383, %v554
        %v672 = vmul.f32 %v386, %v559
        %v673 = vmul.f32 %v391, %v564
        %v674 = vmul.f32 %v394, %v569
        %v675 = vmul.f32 %v399, %v574
        %v676 = vmul.f32 %v402, %v579
        %v677 = vmul.f32 %v407, %v584
        %v678 = vmul.f32 %v410, %v589
        %v679 = vmul.f32 %v415, %v594
        %v680 = vmul.f32 %v418, %v599
        %v681 = vmul.f32 %v423, %v604
        %v682 = vmul.f32 %v426, %v609
        %v683 = vmul.f32 %v431, %v614
        %v684 = vmul.f32 %v434, %v619
        %v685 = vmul.f32 %v439, %v624
        %v686 = vmul.f32 %v442, %v629
        %v687 = vmul.f32 %v447, %v634
        %v688 = vmul.f32 %v450, %v639
        %v689 = vmul.f32 %v455, %v644
        %v690 = vmul.f32 %v458, %v649
        %v691 = vmul.f32 %v463, %v654
        %v692 = vmul.f32 %v466, %v659
        %v693 = vpack.c.bf16 %v662, %v661
        %v694 = vpack.c.bf16 %v664, %v663
        %v695 = vpack.c.bf16 %v666, %v665
        %v696 = vpack.c.bf16 %v668, %v667
        %v697 = vpack.c.bf16 %v670, %v669
        %v698 = vpack.c.bf16 %v672, %v671
        %v699 = vpack.c.bf16 %v674, %v673
        %v700 = vpack.c.bf16 %v676, %v675
        %v701 = vpack.c.bf16 %v678, %v677
        %v702 = vpack.c.bf16 %v680, %v679
        %v703 = vpack.c.bf16 %v682, %v681
        %v704 = vpack.c.bf16 %v684, %v683
        %v705 = vpack.c.bf16 %v686, %v685
        %v706 = vpack.c.bf16 %v688, %v687
        %v707 = vpack.c.bf16 %v690, %v689
        %v708 = vpack.c.bf16 %v692, %v691
        %v725 = vunpack.c.l.b16 %v693
        %v726 = vunpack.c.h.b16 %v693
        %v727 = vunpack.c.l.b16 %v694
        %v728 = vunpack.c.h.b16 %v694
        %v729 = vunpack.c.l.b16 %v695
        %v730 = vunpack.c.h.b16 %v695
        %v731 = vunpack.c.l.b16 %v696
        %v732 = vunpack.c.h.b16 %v696
        %v733 = vunpack.c.l.b16 %v697
        %v734 = vunpack.c.h.b16 %v697
        %v735 = vunpack.c.l.b16 %v698
        %v736 = vunpack.c.h.b16 %v698
        %v737 = vunpack.c.l.b16 %v699
        %v738 = vunpack.c.h.b16 %v699
        %v739 = vunpack.c.l.b16 %v700
        %v740 = vunpack.c.h.b16 %v700
        %v741 = vunpack.c.l.b16 %v701
        %v742 = vunpack.c.h.b16 %v701
        %v743 = vunpack.c.l.b16 %v702
        %v744 = vunpack.c.h.b16 %v702
        %v745 = vunpack.c.l.b16 %v703
        %v746 = vunpack.c.h.b16 %v703
        %v747 = vunpack.c.l.b16 %v704
        %v748 = vunpack.c.h.b16 %v704
        %v749 = vunpack.c.l.b16 %v705
        %v750 = vunpack.c.h.b16 %v705
        %v751 = vunpack.c.l.b16 %v706
        %v752 = vunpack.c.h.b16 %v706
        %v753 = vunpack.c.l.b16 %v707
        %v754 = vunpack.c.h.b16 %v707
        %v755 = vunpack.c.l.b16 %v708
        %v756 = vunpack.c.h.b16 %v708
        %v757 = vpack.c.b16 %v725, %v725
        %v758 = vpack.c.b16 %v726, %v726
        %v759 = vpack.c.b16 %v727, %v727
        %v760 = vpack.c.b16 %v728, %v728
        %v761 = vpack.c.b16 %v729, %v729
        %v762 = vpack.c.b16 %v730, %v730
        %v763 = vpack.c.b16 %v731, %v731
        %v764 = vpack.c.b16 %v732, %v732
        %v765 = vpack.c.b16 %v733, %v733
        %v766 = vpack.c.b16 %v734, %v734
        %v767 = vpack.c.b16 %v735, %v735
        %v768 = vpack.c.b16 %v736, %v736
        %v769 = vpack.c.b16 %v737, %v737
        %v770 = vpack.c.b16 %v738, %v738
        %v771 = vpack.c.b16 %v739, %v739
        %v772 = vpack.c.b16 %v740, %v740
        %v773 = vpack.c.b16 %v741, %v741
        %v774 = vpack.c.b16 %v742, %v742
        %v775 = vpack.c.b16 %v743, %v743
        %v776 = vpack.c.b16 %v744, %v744
        %v777 = vpack.c.b16 %v745, %v745
        %v778 = vpack.c.b16 %v746, %v746
        %v779 = vpack.c.b16 %v747, %v747
        %v780 = vpack.c.b16 %v748, %v748
        %v781 = vpack.c.b16 %v749, %v749
        %v782 = vpack.c.b16 %v750, %v750
        %v783 = vpack.c.b16 %v751, %v751
        %v784 = vpack.c.b16 %v752, %v752
        %v785 = vpack.c.b16 %v753, %v753
        %v786 = vpack.c.b16 %v754, %v754
        %v787 = vpack.c.b16 %v755, %v755
        %v788 = vpack.c.b16 %v756, %v756
        %821 = vst [vmem:[%s180] sm:$0xf] %v757
        %822 = vst [vmem:[%s180 + $0x4] sm:$0xf] %v758
        %823 = vst [vmem:[%s180 + $0x8] sm:$0xf] %v759
        %824 = vst [vmem:[%s180 + $0xc] sm:$0xf] %v760
        %825 = vst [vmem:[%s180 + $0x10] sm:$0xf] %v761
        %826 = vst [vmem:[%s180 + $0x14] sm:$0xf] %v762
        %827 = vst [vmem:[%s180 + $0x18] sm:$0xf] %v763
        %828 = vst [vmem:[%s180 + $0x1c] sm:$0xf] %v764
        %829 = vst [vmem:[%s180 + $0x20] sm:$0xf] %v765
        %830 = vst [vmem:[%s180 + $0x24] sm:$0xf] %v766
        %831 = vst [vmem:[%s180 + $0x28] sm:$0xf] %v767
        %832 = vst [vmem:[%s180 + $0x2c] sm:$0xf] %v768
        %833 = vst [vmem:[%s180 + $0x30] sm:$0xf] %v769
        %834 = vst [vmem:[%s180 + $0x34] sm:$0xf] %v770
        %835 = vst [vmem:[%s180 + $0x38] sm:$0xf] %v771
        %836 = vst [vmem:[%s180 + $0x3c] sm:$0xf] %v772
        %837 = vst [vmem:[%s180 + $0x40] sm:$0xf] %v773
        %838 = vst [vmem:[%s180 + $0x44] sm:$0xf] %v774
        %839 = vst [vmem:[%s180 + $0x48] sm:$0xf] %v775
        %840 = vst [vmem:[%s180 + $0x4c] sm:$0xf] %v776
        %841 = vst [vmem:[%s180 + $0x50] sm:$0xf] %v777
        %842 = vst [vmem:[%s180 + $0x54] sm:$0xf] %v778
        %843 = vst [vmem:[%s180 + $0x58] sm:$0xf] %v779
        %844 = vst [vmem:[%s180 + $0x5c] sm:$0xf] %v780
        %845 = vst [vmem:[%s180 + $0x60] sm:$0xf] %v781
        %846 = vst [vmem:[%s180 + $0x64] sm:$0xf] %v782
        %847 = vst [vmem:[%s180 + $0x68] sm:$0xf] %v783
        %848 = vst [vmem:[%s180 + $0x6c] sm:$0xf] %v784
        %849 = vst [vmem:[%s180 + $0x70] sm:$0xf] %v785
        %850 = vst [vmem:[%s180 + $0x74] sm:$0xf] %v786
        %851 = vst [vmem:[%s180 + $0x78] sm:$0xf] %v787
        %852 = vst [vmem:[%s180 + $0x7c] sm:$0xf] %v788
        %s853 = sand.u32 %s98, 1
        %s854 = scalar_lea.sflag [#allocation3], %s853
        %s855 = sand.u32 %s98, 1
        %s856 = smul.addr %s855, 128
        %s857 = scalar_lea.vmem [#allocation2], %s856
        // Predicated region
        $region33: #{tpu_custom_call.1} parent=31 // pred_check
          %p858 = pneg %p108
        $region34: #{tpu_custom_call.1} parent=31 // pred_check_branch
          %860 = sbr.rel (%p858) target = $region36
        $region35: #{tpu_custom_call.1} parent=31 // pred_region
          %s861 = smul.u32 32, %s17
          %s863 = ssub.s32 2048, 2048
          %864 = vsyncadd %s854, %s863
          %s865 = smul.addr %s861, 64
          %s866 = scalar_lea.hbm %s3, %s865
          %s867 = sshll.u32 %s857, 4
          %s868 = int_to_ptr.vmem [resolvable:$true] %s867
          %873 = dma.vmem_to_hbm [thread:$0]  %s868, 2048, %s866, %s854, 64, 64, 4
        $region36: #{tpu_custom_call.1} parent=31 // pred_fallthru
          _
      $region32: #{tpu_custom_call.1} parent=5 // pred_fallthru
        _
      %p874 = scmp.le.s32.totalorder 2, %s12
      // Predicated region
      $region37: #{tpu_custom_call.1} parent=5 // pred_check
        %p875 = pneg %p874
      $region38: #{tpu_custom_call.1} parent=5 // pred_check_branch
        %877 = sbr.rel (%p875) target = $region40
      $region39: #{tpu_custom_call.1} parent=5 // pred_region
        %s878 = ssub.s32 %s12, 2
        // Predicated region
        $region41: #{tpu_custom_call.1} parent=39 // pred_check
          %p879 = pneg %p114
        $region42: #{tpu_custom_call.1} parent=39 // pred_check_branch
          %881 = sbr.rel (%p879) target = $region44
        $region43: #{tpu_custom_call.1} parent=39 // pred_region
          %s882 = sand.u32 %s99, 1
          %s883 = scalar_lea.sflag [#allocation3], %s882
          %s884 = sand.u32 %s99, 1
          %s885 = smul.addr %s884, 128
          %s886 = scalar_lea.vmem [#allocation2], %s885
          %887 = dma.done %s883, 2048
        $region44: #{tpu_custom_call.1} parent=39 // pred_fallthru
          _
      $region40: #{tpu_custom_call.1} parent=5 // pred_fallthru
        _
    $region6: #{tpu_custom_call.1} parent=1 // loop_footer
      %s16 = sadd.s32 1, %s12
    $region7: #{tpu_custom_call.1} parent=1 // loop_footer_branch
      %11 = sbr.rel target = $region3
    $region8: #{tpu_custom_call.1} parent=1 // loop_exit
      _
    %888 = vsyncpa [#allocation3], 1
    %s889 = scalar_lea.sflag [#allocation3], 1
    %890 = vsyncpa %s889, 1

</llo_original>
